<compile_context>
chip_gen: v6e
topology: v6e:2x2x1
jax: 0.10.0
libtpu: 0.0.40
codegen_flags: <defaults>
</compile_context>

<pallas_src>
import jax
import jax.numpy as jnp
from jax import lax
from jax.experimental import pallas as pl
from jax.experimental.pallas import tpu as pltpu

K = 5           # kernel size
CIN = 14        # in channels (fixed by the module)
COUT = 48       # out channels
NEG_SLOPE = -0.9


def _build_toeplitz_weight(weight, ow, wp):
    """weight: (CIN, COUT, K, K) ConvTranspose2d layout ->
       wbig[kh, w*CIN + ci, ow*COUT + co] = W[ci, co, K-1-kh, K-1-kw] for w = ow + kw,
       zero outside the band.  Shape (K, WP*CIN, OW*COUT).  Parameter transform, done once."""
    wk = jnp.transpose(weight[:, :, ::-1, ::-1], (2, 3, 0, 1))        # (K, K, CIN, COUT)
    wk_flat = wk.reshape(K, K * CIN, COUT)                            # (K, 70, COUT), (kw, ci) flat
    w0 = jnp.pad(wk_flat, ((0, 0), (0, (wp - K) * CIN), (0, 0)))      # (K, WP*CIN, COUT)
    # Shift the 70-row block down by ow*CIN rows for each output column position.
    # No wrap-around: (ow + K) * CIN <= WP * CIN for all valid ow.
    slabs = [jnp.roll(w0, o * CIN, axis=1) for o in range(ow)]
    wbig = jnp.stack(slabs, axis=2)                                   # (K, WP*CIN, OW, COUT)
    return wbig.reshape(K, wp * CIN, ow * COUT)


def conv_transpose_leaky(x_nchw, weight, bias):
    """x_nchw: (N, CIN, H, W) f32; weight: (CIN, COUT, K, K); bias: (COUT,).
       Returns NHWC (N, H+K-1, W+K-1, COUT)."""
    n, cin, h, w = x_nchw.shape
    assert cin == CIN
    oh, ow = h + K - 1, w + K - 1
    hp, wp = h + 2 * (K - 1), w + 2 * (K - 1)
    wpc = wp * CIN

    # NCHW -> NHWC, full-conv padding, flatten (W, CIN) onto lanes and (N, H) onto
    # sublanes.  One small host fusion (the transpose is unavoidable for a
    # channels-last contraction); the pad/reshape ride along for free under jit.
    x_nhwc = jnp.transpose(x_nchw, (0, 2, 3, 1))
    xp = jnp.pad(x_nhwc, ((0, 0), (K - 1, K - 1), (K - 1, K - 1), (0, 0)))
    xflat = xp.reshape(n * hp, wpc)                                   # (40, 196)

    wbig = _build_toeplitz_weight(weight, ow, wp)                     # (5, 196, 480)
    bbig = jnp.tile(bias, (ow,)).reshape(1, ow * COUT)                # (1, 480)

    def kernel(x_ref, w_ref, b_ref, o_ref):
        # x_ref: (N*HP, WP*CIN); w_ref: (K, WP*CIN, OW*COUT); b_ref: (1, OW*COUT)
        # o_ref: (N*OH, OW*COUT)   -- lane-dense output slab
        accs = [jnp.zeros((oh, ow * COUT), jnp.float32) for _ in range(n)]
        for kh in range(K):                       # unrolled: each weight slab loaded once
            w_slab = w_ref[kh]                    # (WP*CIN, OW*COUT)
            for bi in range(n):
                lhs = x_ref[bi * hp + kh: bi * hp + kh + oh, :]       # (OH, WP*CIN)
                accs[bi] = accs[bi] + jnp.dot(lhs, w_slab,
                                              preferred_element_type=jnp.float32)
        bvec = b_ref[...]                         # single (1, OW*COUT) broadcast source
        for bi in range(n):
            y = accs[bi] + bvec
            o_ref[bi * oh:(bi + 1) * oh, :] = jnp.where(y > 0, y, y * NEG_SLOPE)

    out2d = pl.pallas_call(
        kernel,
        out_shape=jax.ShapeDtypeStruct((n * oh, ow * COUT), jnp.float32),
        grid_spec=pltpu.PrefetchScalarGridSpec(
            num_scalar_prefetch=0,
            grid=(1,),                            # whole problem in one block (batch folded in)
            in_specs=[
                pl.BlockSpec((n * hp, wpc), lambda i: (0, 0)),
                pl.BlockSpec((K, wpc, ow * COUT), lambda i: (0, 0, 0)),
                pl.BlockSpec((1, ow * COUT), lambda i: (0, 0)),
            ],
            out_specs=pl.BlockSpec((n * oh, ow * COUT), lambda i: (0, 0)),
        ),
        compiler_params=pltpu.CompilerParams(
            dimension_semantics=("arbitrary",)),
    )(xflat, wbig, bbig)

    return out2d.reshape(n, oh, ow, COUT)         # NHWC


_conv_transpose_leaky_jit = jax.jit(conv_transpose_leaky)


def model_forward(x_nchw, weight, bias):
    x4 = _conv_transpose_leaky_jit(x_nchw, weight, bias)
    # The PyTorch module returns x4.numel() (a Python int).
    return x4, x4.size


if __name__ == "__main__":
    key = jax.random.PRNGKey(0)
    k1, k2, k3 = jax.random.split(key, 3)

    # Small input consistent with the module: N=2, C=14 (required by the conv), H=12, W=6.
    x = jax.random.normal(k1, (2, CIN, 12, 6), dtype=jnp.float32)
    fan = CIN * K * K
    bound = 1.0 / (fan ** 0.5)
    weight = jax.random.uniform(k2, (CIN, COUT, K, K), jnp.float32, -bound, bound)
    bias = jax.random.uniform(k3, (COUT,), jnp.float32, -bound, bound)

    x4, numel = model_forward(x, weight, bias)
    x4 = jax.block_until_ready(x4)

    # Lightweight correctness check against XLA conv (same math path, NHWC, f32).
    xp = jnp.pad(jnp.transpose(x, (0, 2, 3, 1)),
                 ((0, 0), (K - 1, K - 1), (K - 1, K - 1), (0, 0)))
    wk = jnp.transpose(weight[:, :, ::-1, ::-1], (2, 3, 0, 1))
    ref1 = lax.conv_general_dilated(
        xp, wk, window_strides=(1, 1), padding="VALID",
        dimension_numbers=("NHWC", "HWIO", "NHWC"),
        precision=lax.Precision.HIGHEST) + bias[None, None, None, :]
    ref4 = jnp.where(ref1 > 0, ref1, ref1 * NEG_SLOPE)
    assert jnp.allclose(x4, ref4, atol=1e-4, rtol=1e-4), \
        float(jnp.max(jnp.abs(x4 - ref4)))
    assert numel == 2 * COUT * (12 + K - 1) * (6 + K - 1)

    print("KERNEL_OK")
</pallas_src>

<mosaic_0001>
module attributes {stable_mosaic.version = 11 : i64} {
  func.func @kernel(%arg0: i32, %arg1: memref<40x196xf32, #tpu.memory_space<vmem>>, %arg2: memref<5x196x480xf32, #tpu.memory_space<vmem>>, %arg3: memref<1x480xf32, #tpu.memory_space<vmem>>, %arg4: memref<32x480xf32, #tpu.memory_space<vmem>>) attributes {dimension_semantics = [#tpu.dimension_semantics<arbitrary>], iteration_bounds = array<i64: 1>, scalar_prefetch = 0 : i64, scratch_operands = 0 : i64, tpu.core_type = #tpu.core_type<tc>, window_params = [{pipeline_mode = #tpu.pipeline_mode<synchronous>, transform_indices = @transform_0, window_bounds = array<i64: 40, 196>}, {pipeline_mode = #tpu.pipeline_mode<synchronous>, transform_indices = @transform_1, window_bounds = array<i64: 5, 196, 480>}, {pipeline_mode = #tpu.pipeline_mode<synchronous>, transform_indices = @transform_2, window_bounds = array<i64: 1, 480>}, {pipeline_mode = #tpu.pipeline_mode<synchronous>, transform_indices = @transform_3, window_bounds = array<i64: 32, 480>}]} {
    %cst = arith.constant 0.000000e+00 : f32
    %0 = vector.broadcast %cst : f32 to vector<16x480xf32>
    %cst_0 = arith.constant 0.000000e+00 : f32
    %1 = vector.broadcast %cst_0 : f32 to vector<16x480xf32>
    %c0 = arith.constant 0 : index
    %c0_1 = arith.constant 0 : index
    %c0_2 = arith.constant 0 : index
    %2 = vector.load %arg2[%c0, %c0_1, %c0_2] : memref<5x196x480xf32, #tpu.memory_space<vmem>>, vector<1x196x480xf32>
    %3 = vector.shape_cast %2 : vector<1x196x480xf32> to vector<196x480xf32>
    %c0_3 = arith.constant 0 : index
    %c0_4 = arith.constant 0 : index
    %4 = vector.load %arg1[%c0_3, %c0_4] : memref<40x196xf32, #tpu.memory_space<vmem>>, vector<16x196xf32>
    %cst_5 = arith.constant dense<0.000000e+00> : vector<16x480xf32>
    %5 = tpu.matmul %4, %3, %cst_5 {dimension_numbers = #tpu.dot_dimension_numbers<[1], [0], [0], [1], [0, 0, 1, 1], [], []>} : vector<16x196xf32>, vector<196x480xf32>, vector<16x480xf32> -> vector<16x480xf32>
    %6 = arith.addf %0, %5 : vector<16x480xf32>
    %c20 = arith.constant 20 : index
    %c0_6 = arith.constant 0 : index
    %7 = vector.load %arg1[%c20, %c0_6] : memref<40x196xf32, #tpu.memory_space<vmem>>, vector<16x196xf32>
    %cst_7 = arith.constant dense<0.000000e+00> : vector<16x480xf32>
    %8 = tpu.matmul %7, %3, %cst_7 {dimension_numbers = #tpu.dot_dimension_numbers<[1], [0], [0], [1], [0, 0, 1, 1], [], []>} : vector<16x196xf32>, vector<196x480xf32>, vector<16x480xf32> -> vector<16x480xf32>
    %9 = arith.addf %1, %8 : vector<16x480xf32>
    %c1 = arith.constant 1 : index
    %c0_8 = arith.constant 0 : index
    %c0_9 = arith.constant 0 : index
    %10 = vector.load %arg2[%c1, %c0_8, %c0_9] : memref<5x196x480xf32, #tpu.memory_space<vmem>>, vector<1x196x480xf32>
    %11 = vector.shape_cast %10 : vector<1x196x480xf32> to vector<196x480xf32>
    %c1_10 = arith.constant 1 : index
    %c0_11 = arith.constant 0 : index
    %12 = vector.load %arg1[%c1_10, %c0_11] : memref<40x196xf32, #tpu.memory_space<vmem>>, vector<16x196xf32>
    %cst_12 = arith.constant dense<0.000000e+00> : vector<16x480xf32>
    %13 = tpu.matmul %12, %11, %cst_12 {dimension_numbers = #tpu.dot_dimension_numbers<[1], [0], [0], [1], [0, 0, 1, 1], [], []>} : vector<16x196xf32>, vector<196x480xf32>, vector<16x480xf32> -> vector<16x480xf32>
    %14 = arith.addf %6, %13 : vector<16x480xf32>
    %c21 = arith.constant 21 : index
    %c0_13 = arith.constant 0 : index
    %15 = vector.load %arg1[%c21, %c0_13] : memref<40x196xf32, #tpu.memory_space<vmem>>, vector<16x196xf32>
    %cst_14 = arith.constant dense<0.000000e+00> : vector<16x480xf32>
    %16 = tpu.matmul %15, %11, %cst_14 {dimension_numbers = #tpu.dot_dimension_numbers<[1], [0], [0], [1], [0, 0, 1, 1], [], []>} : vector<16x196xf32>, vector<196x480xf32>, vector<16x480xf32> -> vector<16x480xf32>
    %17 = arith.addf %9, %16 : vector<16x480xf32>
    %c2 = arith.constant 2 : index
    %c0_15 = arith.constant 0 : index
    %c0_16 = arith.constant 0 : index
    %18 = vector.load %arg2[%c2, %c0_15, %c0_16] : memref<5x196x480xf32, #tpu.memory_space<vmem>>, vector<1x196x480xf32>
    %19 = vector.shape_cast %18 : vector<1x196x480xf32> to vector<196x480xf32>
    %c2_17 = arith.constant 2 : index
    %c0_18 = arith.constant 0 : index
    %20 = vector.load %arg1[%c2_17, %c0_18] : memref<40x196xf32, #tpu.memory_space<vmem>>, vector<16x196xf32>
    %cst_19 = arith.constant dense<0.000000e+00> : vector<16x480xf32>
    %21 = tpu.matmul %20, %19, %cst_19 {dimension_numbers = #tpu.dot_dimension_numbers<[1], [0], [0], [1], [0, 0, 1, 1], [], []>} : vector<16x196xf32>, vector<196x480xf32>, vector<16x480xf32> -> vector<16x480xf32>
    %22 = arith.addf %14, %21 : vector<16x480xf32>
    %c22 = arith.constant 22 : index
    %c0_20 = arith.constant 0 : index
    %23 = vector.load %arg1[%c22, %c0_20] : memref<40x196xf32, #tpu.memory_space<vmem>>, vector<16x196xf32>
    %cst_21 = arith.constant dense<0.000000e+00> : vector<16x480xf32>
    %24 = tpu.matmul %23, %19, %cst_21 {dimension_numbers = #tpu.dot_dimension_numbers<[1], [0], [0], [1], [0, 0, 1, 1], [], []>} : vector<16x196xf32>, vector<196x480xf32>, vector<16x480xf32> -> vector<16x480xf32>
    %25 = arith.addf %17, %24 : vector<16x480xf32>
    %c3 = arith.constant 3 : index
    %c0_22 = arith.constant 0 : index
    %c0_23 = arith.constant 0 : index
    %26 = vector.load %arg2[%c3, %c0_22, %c0_23] : memref<5x196x480xf32, #tpu.memory_space<vmem>>, vector<1x196x480xf32>
    %27 = vector.shape_cast %26 : vector<1x196x480xf32> to vector<196x480xf32>
    %c3_24 = arith.constant 3 : index
    %c0_25 = arith.constant 0 : index
    %28 = vector.load %arg1[%c3_24, %c0_25] : memref<40x196xf32, #tpu.memory_space<vmem>>, vector<16x196xf32>
    %cst_26 = arith.constant dense<0.000000e+00> : vector<16x480xf32>
    %29 = tpu.matmul %28, %27, %cst_26 {dimension_numbers = #tpu.dot_dimension_numbers<[1], [0], [0], [1], [0, 0, 1, 1], [], []>} : vector<16x196xf32>, vector<196x480xf32>, vector<16x480xf32> -> vector<16x480xf32>
    %30 = arith.addf %22, %29 : vector<16x480xf32>
    %c23 = arith.constant 23 : index
    %c0_27 = arith.constant 0 : index
    %31 = vector.load %arg1[%c23, %c0_27] : memref<40x196xf32, #tpu.memory_space<vmem>>, vector<16x196xf32>
    %cst_28 = arith.constant dense<0.000000e+00> : vector<16x480xf32>
    %32 = tpu.matmul %31, %27, %cst_28 {dimension_numbers = #tpu.dot_dimension_numbers<[1], [0], [0], [1], [0, 0, 1, 1], [], []>} : vector<16x196xf32>, vector<196x480xf32>, vector<16x480xf32> -> vector<16x480xf32>
    %33 = arith.addf %25, %32 : vector<16x480xf32>
    %c4 = arith.constant 4 : index
    %c0_29 = arith.constant 0 : index
    %c0_30 = arith.constant 0 : index
    %34 = vector.load %arg2[%c4, %c0_29, %c0_30] : memref<5x196x480xf32, #tpu.memory_space<vmem>>, vector<1x196x480xf32>
    %35 = vector.shape_cast %34 : vector<1x196x480xf32> to vector<196x480xf32>
    %c4_31 = arith.constant 4 : index
    %c0_32 = arith.constant 0 : index
    %36 = vector.load %arg1[%c4_31, %c0_32] : memref<40x196xf32, #tpu.memory_space<vmem>>, vector<16x196xf32>
    %cst_33 = arith.constant dense<0.000000e+00> : vector<16x480xf32>
    %37 = tpu.matmul %36, %35, %cst_33 {dimension_numbers = #tpu.dot_dimension_numbers<[1], [0], [0], [1], [0, 0, 1, 1], [], []>} : vector<16x196xf32>, vector<196x480xf32>, vector<16x480xf32> -> vector<16x480xf32>
    %38 = arith.addf %30, %37 : vector<16x480xf32>
    %c24 = arith.constant 24 : index
    %c0_34 = arith.constant 0 : index
    %39 = vector.load %arg1[%c24, %c0_34] : memref<40x196xf32, #tpu.memory_space<vmem>>, vector<16x196xf32>
    %cst_35 = arith.constant dense<0.000000e+00> : vector<16x480xf32>
    %40 = tpu.matmul %39, %35, %cst_35 {dimension_numbers = #tpu.dot_dimension_numbers<[1], [0], [0], [1], [0, 0, 1, 1], [], []>} : vector<16x196xf32>, vector<196x480xf32>, vector<16x480xf32> -> vector<16x480xf32>
    %41 = arith.addf %33, %40 : vector<16x480xf32>
    %c0_36 = arith.constant 0 : index
    %c0_37 = arith.constant 0 : index
    %42 = vector.load %arg3[%c0_36, %c0_37] : memref<1x480xf32, #tpu.memory_space<vmem>>, vector<1x480xf32>
    %43 = vector.broadcast %42 : vector<1x480xf32> to vector<16x480xf32>
    %44 = arith.addf %38, %43 : vector<16x480xf32>
    %cst_38 = arith.constant 0.000000e+00 : f32
    %45 = vector.broadcast %cst_38 : f32 to vector<16x480xf32>
    %46 = arith.cmpf ogt, %44, %45 : vector<16x480xf32>
    %cst_39 = arith.constant -0.899999976 : f32
    %47 = vector.broadcast %cst_39 : f32 to vector<16x480xf32>
    %48 = arith.mulf %44, %47 : vector<16x480xf32>
    %49 = arith.select %46, %44, %48 : vector<16x480xi1>, vector<16x480xf32>
    %c0_40 = arith.constant 0 : index
    %c0_41 = arith.constant 0 : index
    %50 = vector.load %arg4[%c0_40, %c0_41] : memref<32x480xf32, #tpu.memory_space<vmem>>, vector<16x480xf32>
    tpu.vector_store %arg4[%c0_40, %c0_41], %49 {strides = array<i32>} : memref<32x480xf32, #tpu.memory_space<vmem>>, vector<16x480xf32>,
    %51 = vector.broadcast %42 : vector<1x480xf32> to vector<16x480xf32>
    %52 = arith.addf %41, %51 : vector<16x480xf32>
    %cst_42 = arith.constant 0.000000e+00 : f32
    %53 = vector.broadcast %cst_42 : f32 to vector<16x480xf32>
    %54 = arith.cmpf ogt, %52, %53 : vector<16x480xf32>
    %cst_43 = arith.constant -0.899999976 : f32
    %55 = vector.broadcast %cst_43 : f32 to vector<16x480xf32>
    %56 = arith.mulf %52, %55 : vector<16x480xf32>
    %57 = arith.select %54, %52, %56 : vector<16x480xi1>, vector<16x480xf32>
    %c16 = arith.constant 16 : index
    %c0_44 = arith.constant 0 : index
    %58 = vector.load %arg4[%c16, %c0_44] : memref<32x480xf32, #tpu.memory_space<vmem>>, vector<16x480xf32>
    tpu.vector_store %arg4[%c16, %c0_44], %57 {strides = array<i32>} : memref<32x480xf32, #tpu.memory_space<vmem>>, vector<16x480xf32>,
    return
  }
  func.func @transform_0(%arg0: i32) -> (i32, i32) {
    %c0_i32 = arith.constant 0 : i32
    %c0_i32_0 = arith.constant 0 : i32
    %c0_i32_1 = arith.constant 0 : i32
    return %c0_i32, %c0_i32_0 : i32, i32
  }
  func.func @transform_1(%arg0: i32) -> (i32, i32, i32) {
    %c0_i32 = arith.constant 0 : i32
    %c0_i32_0 = arith.constant 0 : i32
    %c0_i32_1 = arith.constant 0 : i32
    %c0_i32_2 = arith.constant 0 : i32
    return %c0_i32, %c0_i32_0, %c0_i32_1 : i32, i32, i32
  }
  func.func @transform_2(%arg0: i32) -> (i32, i32) {
    %c0_i32 = arith.constant 0 : i32
    %c0_i32_0 = arith.constant 0 : i32
    %c0_i32_1 = arith.constant 0 : i32
    return %c0_i32, %c0_i32_0 : i32, i32
  }
  func.func @transform_3(%arg0: i32) -> (i32, i32) {
    %c0_i32 = arith.constant 0 : i32
    %c0_i32_0 = arith.constant 0 : i32
    %c0_i32_1 = arith.constant 0 : i32
    return %c0_i32, %c0_i32_0 : i32, i32
  }
}

</mosaic_0001>

<llo_original>
// kernel: tile.8
$region0: #{tile.8}
  #allocation0 [shape = 's32[1]{0}', space=sflag, size = 0x4, scoped, tag = 'scoped memory for tile.8']
  %s0 = inlined_call_operand.vmem [shape: f32[48], index: 0, kind: input, shape index: {}]
  %s1 = inlined_call_operand.vmem [shape: f32[10,48], index: 1, kind: output, shape index: {}]
  // Predicated region
  $region2: #{tile.8} parent=0 // pred_check
    _
  $region3: #{tile.8} parent=0 // pred_check_branch
    %3 = sbr.rel (0) target = $region5
  $region4: #{tile.8} parent=0 // pred_region
    _
  $region5: #{tile.8} parent=0 // pred_fallthru
    _
  %v4 = vld [vmem:[%s0] ss:$0 sm:$0xff]
  %5 = vst [vmem:[%s1] sm:$0xff] %v4
  %s6 = scalar_lea.vmem %s1, 8
  %7 = vst [vmem:[%s6] sm:$0xff] %v4

// kernel: tile.9
$region0: #{tile.9}
  %s0 = inlined_call_operand.vmem [shape: f32[10,48], index: 0, kind: input, shape index: {}]
  %s1 = inlined_call_operand.vmem [shape: f32[1,480], index: 1, kind: output, shape index: {}]
  $region1: #{tile.9} parent=0
    #allocation0 [shape = 'u8[16384]{0}', space=vmem, size = 0x4000, scoped, tag = 'scoped mem for output reshape']
    %s2 = smov 3
    %v3 = vld [vmem:[%s0] ss:$8 sm:%s2]
    %vm4 = vcmask 392192
    %5 = vst.msk [vmem:[#allocation0] ss:$24 sm:$0x3] %vm4, %v3
    %s6 = scalar_lea.vmem %s0, 5
    %v7 = vld [vmem:[%s6] sm:$0x1]
    %s8 = scalar_lea.vmem %s0, 5
    %v9 = vld [vmem:[%s8] sm:$0x1]
    %vm10 = vcmask 130048
    %v11 = vsel %vm10, %v9, %v7
    %12 = vrot.lane.b32.xlu0 %v11, 112
    %v13 = vpop.permute.xlu0 %12
    %vm14 = vcmask 261120
    %s15 = scalar_lea.vmem [#allocation0], 16
    %16 = vst.msk [vmem:[%s15] sm:$0x1] %vm14, %v13
    %vm17 = vcmask 1048448
    %s18 = scalar_lea.vmem [#allocation0], 8
    %19 = vst.msk [vmem:[%s18] sm:$0x1] %vm17, %v13
    %s20 = scalar_lea.vmem %s0, 2
    %v21 = vld [vmem:[%s20] sm:$0x1]
    %s22 = scalar_lea.vmem %s0, 2
    %v23 = vld [vmem:[%s22] sm:$0x1]
    %vm24 = vcmask 261120
    %v25 = vsel %vm24, %v23, %v21
    %26 = vrot.lane.b32.xlu0 %v25, 96
    %v27 = vpop.permute.xlu0 %26
    %vm28 = vcmask 130048
    %s29 = scalar_lea.vmem [#allocation0], 8
    %30 = vst.msk [vmem:[%s29] sm:$0x1] %vm28, %v27
    %vm31 = vcmask 1048320
    %32 = vst.msk [vmem:[#allocation0] sm:$0x1] %vm31, %v27
    %s33 = scalar_lea.vmem %s0, 7
    %v34 = vld [vmem:[%s33] sm:$0x1]
    %35 = vrot.lane.b32.xlu0 %v34, 80
    %v36 = vpop.permute.xlu0 %35
    %vm37 = vcmask 1048192
    %s38 = scalar_lea.vmem [#allocation0], 16
    %39 = vst.msk [vmem:[%s38] sm:$0x1] %vm37, %v36
    %s40 = scalar_lea.vmem %s0, 4
    %v41 = vld [vmem:[%s40] sm:$0x1]
    %42 = vrot.lane.b32.xlu0 %v41, 64
    %v43 = vpop.permute.xlu0 %42
    %vm44 = vcmask 916992
    %s45 = scalar_lea.vmem [#allocation0], 8
    %46 = vst.msk [vmem:[%s45] sm:$0x1] %vm44, %v43
    %s47 = scalar_lea.vmem %s0, 1
    %s48 = smov 3
    %v49 = vld [vmem:[%s47] ss:$8 sm:%s48]
    %50 = vrot.lane.b32.xlu0 %v49, 48
    %v51 = vpop.permute.xlu0 %50
    %vm52 = vcmask 785792
    %53 = vst.msk [vmem:[#allocation0] ss:$24 sm:$0x3] %vm52, %v51
    %s54 = scalar_lea.vmem %s0, 6
    %v55 = vld [vmem:[%s54] sm:$0x1]
    %56 = vrot.lane.b32.xlu0 %v55, 32
    %v57 = vpop.permute.xlu0 %56
    %vm58 = vcmask 654592
    %s59 = scalar_lea.vmem [#allocation0], 16
    %60 = vst.msk [vmem:[%s59] sm:$0x1] %vm58, %v57
    %s61 = scalar_lea.vmem %s0, 3
    %v62 = vld [vmem:[%s61] sm:$0x1]
    %63 = vrot.lane.b32.xlu0 %v62, 16
    %v64 = vpop.permute.xlu0 %63
    %vm65 = vcmask 523392
    %s66 = scalar_lea.vmem [#allocation0], 8
    %67 = vst.msk [vmem:[%s66] sm:$0x1] %vm65, %v64
    %s69 = sshll.u32 1, 1
    %s70 = ssub.s32 %s69, 1
    %v72 = vld [vmem:[#allocation0] sm:%s70]
    %s73 = sshll.u32 1, 1
    %s74 = ssub.s32 %s73, 1
    %75 = vst [vmem:[%s1] sm:%s74] %v72
    %s76 = scalar_lea.vmem [#allocation0], 8
    %v77 = vld [vmem:[%s76] sm:%s70]
    %s78 = sshll.u32 1, 1
    %s79 = ssub.s32 %s78, 1
    %s80 = scalar_lea.vmem %s1, 1
    %81 = vst [vmem:[%s80] sm:%s79] %v77
    %s82 = scalar_lea.vmem [#allocation0], 16
    %v83 = vld [vmem:[%s82] sm:%s70]
    %s84 = sshll.u32 1, 1
    %s85 = ssub.s32 %s84, 1
    %s86 = smul.addr 1, 2
    %s87 = scalar_lea.vmem %s1, %s86
    %88 = vst [vmem:[%s87] sm:%s85] %v83
    %s89 = scalar_lea.vmem [#allocation0], 24
    %v90 = vld [vmem:[%s89] sm:%s70]
    %s91 = sshll.u32 1, 1
    %s92 = ssub.s32 %s91, 1
    %s93 = smul.addr 1, 3
    %s94 = scalar_lea.vmem %s1, %s93
    %95 = vst [vmem:[%s94] sm:%s92] %v90

// kernel: conv_transpose_leaky.1
$region0: #{conv_transpose_leaky.1}
  #allocation0 [shape = 'u32[]', space=smem, size = 0x4, offset = 0x4, fixed_abs, tag = 'smem constant byte address 0x4 - core index']
  #allocation1 [shape = 'u32[144,128]{1,0:T(1,128)}', space=vmem, size = 0x12000, scoped, tag = 'internal scratch']
  %s0 = inlined_call_operand.vmem [shape: f32[40,196], index: 0, kind: input, shape index: {}]
  %s1 = inlined_call_operand.vmem [shape: f32[5,196,480], index: 1, kind: input, shape index: {}]
  %s2 = inlined_call_operand.vmem [shape: f32[1,480], index: 2, kind: input, shape index: {}]
  %s3 = inlined_call_operand.vmem [shape: f32[32,480], index: 3, kind: output, shape index: {}]
  %s4 = sld [smem:[#allocation0]]
  $region22: #{conv_transpose_leaky.1} parent=0
    _
  %s6 = ssub.s32 1, %s4
  %s7 = scalar_select 0, %s6, %s4
  // Predicated region
  $region2: #{conv_transpose_leaky.1} parent=0 // pred_check
    _
  $region3: #{conv_transpose_leaky.1} parent=0 // pred_check_branch
    %9 = sbr.rel (0) target = $region5
  $region4: #{conv_transpose_leaky.1} parent=0 // pred_region
    _
  $region5: #{conv_transpose_leaky.1} parent=0 // pred_fallthru
    _
  // Predicated region
  $region6: #{conv_transpose_leaky.1} parent=0 // pred_check
    _
  $region7: #{conv_transpose_leaky.1} parent=0 // pred_check_branch
    %11 = sbr.rel (0) target = $region9
  $region8: #{conv_transpose_leaky.1} parent=0 // pred_region
    _
  $region9: #{conv_transpose_leaky.1} parent=0 // pred_fallthru
    _
  // Predicated region
  $region10: #{conv_transpose_leaky.1} parent=0 // pred_check
    _
  $region11: #{conv_transpose_leaky.1} parent=0 // pred_check_branch
    %13 = sbr.rel (0) target = $region13
  $region12: #{conv_transpose_leaky.1} parent=0 // pred_region
    _
  $region13: #{conv_transpose_leaky.1} parent=0 // pred_fallthru
    _
  %v14 = vld [vmem:[%s1] sm:$0xff]
  %v15 = vld [vmem:[%s1 + $0x8] sm:$0xff]
  %v16 = vld [vmem:[%s1 + $0x10] sm:$0xff]
  %v17 = vld [vmem:[%s1 + $0x18] sm:$0xff]
  %v18 = vld [vmem:[%s1 + $0x20] sm:$0xff]
  %v19 = vld [vmem:[%s1 + $0x28] sm:$0xff]
  %v20 = vld [vmem:[%s1 + $0x30] sm:$0xff]
  %v21 = vld [vmem:[%s1 + $0x38] sm:$0xff]
  %v22 = vld [vmem:[%s1 + $0x40] sm:$0xff]
  %v23 = vld [vmem:[%s1 + $0x48] sm:$0xff]
  %v24 = vld [vmem:[%s1 + $0x50] sm:$0xff]
  %v25 = vld [vmem:[%s1 + $0x58] sm:$0xff]
  %v26 = vld [vmem:[%s1 + $0x60] sm:$0xff]
  %v27 = vld [vmem:[%s1 + $0x68] sm:$0xff]
  %v28 = vld [vmem:[%s1 + $0x70] sm:$0xff]
  %v29 = vld [vmem:[%s1 + $0x78] sm:$0xff]
  %v30 = vld [vmem:[%s1 + $0x80] sm:$0xff]
  %v31 = vld [vmem:[%s1 + $0x88] sm:$0xff]
  %v32 = vld [vmem:[%s1 + $0x90] sm:$0xff]
  %v33 = vld [vmem:[%s1 + $0x98] sm:$0xff]
  %v34 = vld [vmem:[%s1 + $0xa0] sm:$0xff]
  %v35 = vld [vmem:[%s1 + $0xa8] sm:$0xff]
  %v36 = vld [vmem:[%s1 + $0xb0] sm:$0xff]
  %v37 = vld [vmem:[%s1 + $0xb8] sm:$0xff]
  %v38 = vld [vmem:[%s1 + $0xc0] sm:$0xff]
  %v39 = vld [vmem:[%s1 + $0xc8] sm:$0xff]
  %v40 = vld [vmem:[%s1 + $0xd0] sm:$0xff]
  %v41 = vld [vmem:[%s1 + $0xd8] sm:$0xff]
  %v42 = vld [vmem:[%s1 + $0xe0] sm:$0xff]
  %v43 = vld [vmem:[%s1 + $0xe8] sm:$0xff]
  %v44 = vld [vmem:[%s1 + $0xf0] sm:$0xff]
  %v45 = vld [vmem:[%s1 + $0xf8] sm:$0xff]
  %v46 = vld [vmem:[%s1 + $0x100] sm:$0xff]
  %v47 = vld [vmem:[%s1 + $0x108] sm:$0xff]
  %v48 = vld [vmem:[%s1 + $0x110] sm:$0xff]
  %v49 = vld [vmem:[%s1 + $0x118] sm:$0xff]
  %v50 = vld [vmem:[%s1 + $0x120] sm:$0xff]
  %v51 = vld [vmem:[%s1 + $0x128] sm:$0xff]
  %v52 = vld [vmem:[%s1 + $0x130] sm:$0xff]
  %v53 = vld [vmem:[%s1 + $0x138] sm:$0xff]
  %v54 = vld [vmem:[%s1 + $0x140] sm:$0xff]
  %v55 = vld [vmem:[%s1 + $0x148] sm:$0xff]
  %v56 = vld [vmem:[%s1 + $0x150] sm:$0xff]
  %v57 = vld [vmem:[%s1 + $0x158] sm:$0xff]
  %v58 = vld [vmem:[%s1 + $0x160] sm:$0xff]
  %v59 = vld [vmem:[%s1 + $0x168] sm:$0xff]
  %v60 = vld [vmem:[%s1 + $0x170] sm:$0xff]
  %v61 = vld [vmem:[%s1 + $0x178] sm:$0xff]
  %v62 = vld [vmem:[%s1 + $0x180] sm:$0xff]
  %v63 = vld [vmem:[%s1 + $0x188] sm:$0xff]
  %v64 = vld [vmem:[%s1 + $0x190] sm:$0xff]
  %v65 = vld [vmem:[%s1 + $0x198] sm:$0xff]
  %v66 = vld [vmem:[%s1 + $0x1a0] sm:$0xff]
  %v67 = vld [vmem:[%s1 + $0x1a8] sm:$0xff]
  %v68 = vld [vmem:[%s1 + $0x1b0] sm:$0xff]
  %v69 = vld [vmem:[%s1 + $0x1b8] sm:$0xff]
  %v70 = vld [vmem:[%s1 + $0x1c0] sm:$0xff]
  %v71 = vld [vmem:[%s1 + $0x1c8] sm:$0xff]
  %v72 = vld [vmem:[%s1 + $0x1d0] sm:$0xff]
  %v73 = vld [vmem:[%s1 + $0x1d8] sm:$0xff]
  %v74 = vld [vmem:[%s1 + $0x1e0] sm:$0xff]
  %v75 = vld [vmem:[%s1 + $0x1e8] sm:$0xff]
  %v76 = vld [vmem:[%s1 + $0x1f0] sm:$0xff]
  %v77 = vld [vmem:[%s1 + $0x1f8] sm:$0xff]
  %v78 = vld [vmem:[%s1 + $0x200] sm:$0xff]
  %v79 = vld [vmem:[%s1 + $0x208] sm:$0xff]
  %v80 = vld [vmem:[%s1 + $0x210] sm:$0xff]
  %v81 = vld [vmem:[%s1 + $0x218] sm:$0xff]
  %v82 = vld [vmem:[%s1 + $0x220] sm:$0xff]
  %v83 = vld [vmem:[%s1 + $0x228] sm:$0xff]
  %v84 = vld [vmem:[%s1 + $0x230] sm:$0xff]
  %v85 = vld [vmem:[%s1 + $0x238] sm:$0xff]
  %v86 = vld [vmem:[%s1 + $0x240] sm:$0xff]
  %v87 = vld [vmem:[%s1 + $0x248] sm:$0xff]
  %v88 = vld [vmem:[%s1 + $0x250] sm:$0xff]
  %v89 = vld [vmem:[%s1 + $0x258] sm:$0xff]
  %v90 = vld [vmem:[%s1 + $0x260] sm:$0xff]
  %v91 = vld [vmem:[%s1 + $0x268] sm:$0xff]
  %v92 = vld [vmem:[%s1 + $0x270] sm:$0xff]
  %v93 = vld [vmem:[%s1 + $0x278] sm:$0xff]
  %v94 = vld [vmem:[%s1 + $0x280] sm:$0xff]
  %v95 = vld [vmem:[%s1 + $0x288] sm:$0xff]
  %v96 = vld [vmem:[%s1 + $0x290] sm:$0xff]
  %v97 = vld [vmem:[%s1 + $0x298] sm:$0xff]
  %v98 = vld [vmem:[%s1 + $0x2a0] sm:$0xff]
  %v99 = vld [vmem:[%s1 + $0x2a8] sm:$0xff]
  %v100 = vld [vmem:[%s1 + $0x2b0] sm:$0xff]
  %v101 = vld [vmem:[%s1 + $0x2b8] sm:$0xff]
  %v102 = vld [vmem:[%s1 + $0x2c0] sm:$0xff]
  %v103 = vld [vmem:[%s1 + $0x2c8] sm:$0xff]
  %v104 = vld [vmem:[%s1 + $0x2d0] sm:$0xff]
  %v105 = vld [vmem:[%s1 + $0x2d8] sm:$0xff]
  %v106 = vld [vmem:[%s1 + $0x2e0] sm:$0xff]
  %v107 = vld [vmem:[%s1 + $0x2e8] sm:$0xff]
  %v108 = vld [vmem:[%s1 + $0x2f0] sm:$0xff]
  %v109 = vld [vmem:[%s1 + $0x2f8] sm:$0xff]
  %v110 = vld [vmem:[%s1 + $0x300] sm:$0xf]
  %v111 = vld [vmem:[%s1 + $0x308] sm:$0xf]
  %v112 = vld [vmem:[%s1 + $0x310] sm:$0xf]
  %v113 = vld [vmem:[%s1 + $0x318] sm:$0xf]
  %v114 = vld [vmem:[%s0] sm:$0xff]
  %v115 = vld [vmem:[%s0 + $0x8] sm:$0xff]
  %v116 = vld [vmem:[%s0 + $0x10] sm:$0xff]
  %v117 = vld [vmem:[%s0 + $0x18] sm:$0xff]
  %v118 = vld [vmem:[%s0 + $0x20] sm:$0xf0]
  %v119 = vld [vmem:[%s0 + $0x28] sm:$0xf0]
  %v120 = vld [vmem:[%s0 + $0x30] sm:$0xff]
  %v121 = vld [vmem:[%s0 + $0x38] sm:$0xff]
  %v122 = vld [vmem:[%s0 + $0x40] sm:$0xf]
  %v123 = vld [vmem:[%s0 + $0x48] sm:$0xf]
  %s124 = scalar_lea.vmem %s1, 800
  %v125 = vld [vmem:[%s124] sm:$0xff]
  %v126 = vld [vmem:[%s124 + $0x8] sm:$0xff]
  %v127 = vld [vmem:[%s124 + $0x10] sm:$0xff]
  %v128 = vld [vmem:[%s124 + $0x18] sm:$0xff]
  %v129 = vld [vmem:[%s124 + $0x20] sm:$0xff]
  %v130 = vld [vmem:[%s124 + $0x28] sm:$0xff]
  %v131 = vld [vmem:[%s124 + $0x30] sm:$0xff]
  %v132 = vld [vmem:[%s124 + $0x38] sm:$0xff]
  %v133 = vld [vmem:[%s124 + $0x40] sm:$0xff]
  %v134 = vld [vmem:[%s124 + $0x48] sm:$0xff]
  %v135 = vld [vmem:[%s124 + $0x50] sm:$0xff]
  %v136 = vld [vmem:[%s124 + $0x58] sm:$0xff]
  %v137 = vld [vmem:[%s124 + $0x60] sm:$0xff]
  %v138 = vld [vmem:[%s124 + $0x68] sm:$0xff]
  %v139 = vld [vmem:[%s124 + $0x70] sm:$0xff]
  %v140 = vld [vmem:[%s124 + $0x78] sm:$0xff]
  %v141 = vld [vmem:[%s124 + $0x80] sm:$0xff]
  %v142 = vld [vmem:[%s124 + $0x88] sm:$0xff]
  %v143 = vld [vmem:[%s124 + $0x90] sm:$0xff]
  %v144 = vld [vmem:[%s124 + $0x98] sm:$0xff]
  %v145 = vld [vmem:[%s124 + $0xa0] sm:$0xff]
  %v146 = vld [vmem:[%s124 + $0xa8] sm:$0xff]
  %v147 = vld [vmem:[%s124 + $0xb0] sm:$0xff]
  %v148 = vld [vmem:[%s124 + $0xb8] sm:$0xff]
  %v149 = vld [vmem:[%s124 + $0xc0] sm:$0xff]
  %v150 = vld [vmem:[%s124 + $0xc8] sm:$0xff]
  %v151 = vld [vmem:[%s124 + $0xd0] sm:$0xff]
  %v152 = vld [vmem:[%s124 + $0xd8] sm:$0xff]
  %v153 = vld [vmem:[%s124 + $0xe0] sm:$0xff]
  %v154 = vld [vmem:[%s124 + $0xe8] sm:$0xff]
  %v155 = vld [vmem:[%s124 + $0xf0] sm:$0xff]
  %v156 = vld [vmem:[%s124 + $0xf8] sm:$0xff]
  %v157 = vld [vmem:[%s124 + $0x100] sm:$0xff]
  %v158 = vld [vmem:[%s124 + $0x108] sm:$0xff]
  %v159 = vld [vmem:[%s124 + $0x110] sm:$0xff]
  %v160 = vld [vmem:[%s124 + $0x118] sm:$0xff]
  %v161 = vld [vmem:[%s124 + $0x120] sm:$0xff]
  %v162 = vld [vmem:[%s124 + $0x128] sm:$0xff]
  %v163 = vld [vmem:[%s124 + $0x130] sm:$0xff]
  %v164 = vld [vmem:[%s124 + $0x138] sm:$0xff]
  %v165 = vld [vmem:[%s124 + $0x140] sm:$0xff]
  %v166 = vld [vmem:[%s124 + $0x148] sm:$0xff]
  %v167 = vld [vmem:[%s124 + $0x150] sm:$0xff]
  %v168 = vld [vmem:[%s124 + $0x158] sm:$0xff]
  %v169 = vld [vmem:[%s124 + $0x160] sm:$0xff]
  %v170 = vld [vmem:[%s124 + $0x168] sm:$0xff]
  %v171 = vld [vmem:[%s124 + $0x170] sm:$0xff]
  %v172 = vld [vmem:[%s124 + $0x178] sm:$0xff]
  %v173 = vld [vmem:[%s124 + $0x180] sm:$0xff]
  %v174 = vld [vmem:[%s124 + $0x188] sm:$0xff]
  %v175 = vld [vmem:[%s124 + $0x190] sm:$0xff]
  %v176 = vld [vmem:[%s124 + $0x198] sm:$0xff]
  %v177 = vld [vmem:[%s124 + $0x1a0] sm:$0xff]
  %v178 = vld [vmem:[%s124 + $0x1a8] sm:$0xff]
  %v179 = vld [vmem:[%s124 + $0x1b0] sm:$0xff]
  %v180 = vld [vmem:[%s124 + $0x1b8] sm:$0xff]
  %v181 = vld [vmem:[%s124 + $0x1c0] sm:$0xff]
  %v182 = vld [vmem:[%s124 + $0x1c8] sm:$0xff]
  %v183 = vld [vmem:[%s124 + $0x1d0] sm:$0xff]
  %v184 = vld [vmem:[%s124 + $0x1d8] sm:$0xff]
  %v185 = vld [vmem:[%s124 + $0x1e0] sm:$0xff]
  %v186 = vld [vmem:[%s124 + $0x1e8] sm:$0xff]
  %v187 = vld [vmem:[%s124 + $0x1f0] sm:$0xff]
  %v188 = vld [vmem:[%s124 + $0x1f8] sm:$0xff]
  %v189 = vld [vmem:[%s124 + $0x200] sm:$0xff]
  %v190 = vld [vmem:[%s124 + $0x208] sm:$0xff]
  %v191 = vld [vmem:[%s124 + $0x210] sm:$0xff]
  %v192 = vld [vmem:[%s124 + $0x218] sm:$0xff]
  %v193 = vld [vmem:[%s124 + $0x220] sm:$0xff]
  %v194 = vld [vmem:[%s124 + $0x228] sm:$0xff]
  %v195 = vld [vmem:[%s124 + $0x230] sm:$0xff]
  %v196 = vld [vmem:[%s124 + $0x238] sm:$0xff]
  %v197 = vld [vmem:[%s124 + $0x240] sm:$0xff]
  %v198 = vld [vmem:[%s124 + $0x248] sm:$0xff]
  %v199 = vld [vmem:[%s124 + $0x250] sm:$0xff]
  %v200 = vld [vmem:[%s124 + $0x258] sm:$0xff]
  %v201 = vld [vmem:[%s124 + $0x260] sm:$0xff]
  %v202 = vld [vmem:[%s124 + $0x268] sm:$0xff]
  %v203 = vld [vmem:[%s124 + $0x270] sm:$0xff]
  %v204 = vld [vmem:[%s124 + $0x278] sm:$0xff]
  %v205 = vld [vmem:[%s124 + $0x280] sm:$0xff]
  %v206 = vld [vmem:[%s124 + $0x288] sm:$0xff]
  %v207 = vld [vmem:[%s124 + $0x290] sm:$0xff]
  %v208 = vld [vmem:[%s124 + $0x298] sm:$0xff]
  %v209 = vld [vmem:[%s124 + $0x2a0] sm:$0xff]
  %v210 = vld [vmem:[%s124 + $0x2a8] sm:$0xff]
  %v211 = vld [vmem:[%s124 + $0x2b0] sm:$0xff]
  %v212 = vld [vmem:[%s124 + $0x2b8] sm:$0xff]
  %v213 = vld [vmem:[%s124 + $0x2c0] sm:$0xff]
  %v214 = vld [vmem:[%s124 + $0x2c8] sm:$0xff]
  %v215 = vld [vmem:[%s124 + $0x2d0] sm:$0xff]
  %v216 = vld [vmem:[%s124 + $0x2d8] sm:$0xff]
  %v217 = vld [vmem:[%s124 + $0x2e0] sm:$0xff]
  %v218 = vld [vmem:[%s124 + $0x2e8] sm:$0xff]
  %v219 = vld [vmem:[%s124 + $0x2f0] sm:$0xff]
  %v220 = vld [vmem:[%s124 + $0x2f8] sm:$0xff]
  %v221 = vld [vmem:[%s124 + $0x300] sm:$0xf]
  %v222 = vld [vmem:[%s124 + $0x308] sm:$0xf]
  %v223 = vld [vmem:[%s124 + $0x310] sm:$0xf]
  %v224 = vld [vmem:[%s124 + $0x318] sm:$0xf]
  %v225 = vld [vmem:[%s0] sm:$0xfe]
  %v226 = vld [vmem:[%s0 + $0x8] sm:$0xfe]
  %v227 = vld [vmem:[%s0 + $0x20] sm:$0x1]
  %v228 = vld [vmem:[%s0 + $0x28] sm:$0x1]
  %vm235 = vcmask 1046528
  %v236 = vrot.slane %v225, 1
  %v237 = vrot.slane %v116, 1
  %v238 = vsel %vm235, %v236, %v237
  %v239 = vrot.slane %v226, 1
  %v240 = vrot.slane %v117, 1
  %v241 = vsel %vm235, %v239, %v240
  %v242 = vrot.slane %v227, 1
  %v243 = vsel %vm235, %v237, %v242
  %v244 = vrot.slane %v228, 1
  %v245 = vsel %vm235, %v240, %v244
  %vm248 = vcmask 556032
  %v249 = vsel %vm248, %v241, 0
  %v251 = vsel %vm248, %v245, 0
  %vm253 = vcmask 1043456
  %v255 = vsel %vm253, %v221, 0
  %v258 = vsel %vm253, %v222, 0
  %v261 = vsel %vm253, %v223, 0
  %v264 = vsel %vm253, %v224, 0
  %266 = vmatprep.subr.mxu0 %v186
  %267 = vmatpush1.msra.mxu0 %v185
  %268 = vmatprep.subr.mxu0 %v182
  %269 = vmatpush1.msra.mxu0 %v181
  %270 = vmatprep.subr.mxu0 %v178
  %271 = vmatpush1.msra.mxu0 %v177
  %272 = vmatprep.subr.mxu0 %v174
  %273 = vmatpush1.msra.mxu0 %v173
  %274 = vmatprep.subr.mxu0 %v170
  %275 = vmatpush1.msra.mxu0 %v169
  %276 = vmatprep.subr.mxu0 %v166
  %277 = vmatpush1.msra.mxu0 %v165
  %278 = vmatprep.subr.mxu0 %v162
  %279 = vmatpush1.msra.mxu0 %v161
  %280 = vmatprep.subr.mxu0 %v158
  %281 = vmatpush1.msra.mxu0 %v157
  %282 = vmatprep.subr.mxu0 %v154
  %283 = vmatpush1.msra.mxu0 %v153
  %284 = vmatprep.subr.mxu0 %v150
  %285 = vmatpush1.msra.mxu0 %v149
  %286 = vmatprep.subr.mxu0 %v146
  %287 = vmatpush1.msra.mxu0 %v145
  %288 = vmatprep.subr.mxu0 %v142
  %289 = vmatpush1.msra.mxu0 %v141
  %290 = vmatprep.subr.mxu0 %v138
  %291 = vmatpush1.msra.mxu0 %v137
  %292 = vmatprep.subr.mxu0 %v134
  %293 = vmatpush1.msra.mxu0 %v133
  %294 = vmatprep.subr.mxu0 %v130
  %295 = vmatpush1.msra.mxu0 %v129
  %296 = vmatprep.subr.mxu0 %v126
  %297 = vmatpush1.msra.mxu0 %v125
  %298 = vmatprep.subr.mxu0 0.0
  %299 = vmatpush2.msra.mxu0 0.0
  %300 = vmatprep.subr.mxu0 0.0
  %301 = vmatpush2.msra.mxu0 0.0
  %302 = vmatprep.subr.mxu0 0.0
  %303 = vmatpush2.msra.mxu0 0.0
  %304 = vmatprep.subr.mxu0 0.0
  %305 = vmatpush2.msra.mxu0 0.0
  %306 = vmatprep.subr.mxu0 0.0
  %307 = vmatpush2.msra.mxu0 0.0
  %308 = vmatprep.subr.mxu0 0.0
  %309 = vmatpush2.msra.mxu0 0.0
  %310 = vmatprep.subr.mxu0 0.0
  %311 = vmatpush2.msra.mxu0 0.0
  %312 = vmatprep.subr.mxu0 %v258
  %313 = vmatpush2.msra.mxu0 %v255
  %314 = vmatprep.subr.mxu0 %v218
  %315 = vmatpush2.msra.mxu0 %v217
  %316 = vmatprep.subr.mxu0 %v214
  %317 = vmatpush2.msra.mxu0 %v213
  %318 = vmatprep.subr.mxu0 %v210
  %319 = vmatpush2.msra.mxu0 %v209
  %320 = vmatprep.subr.mxu0 %v206
  %321 = vmatpush2.msra.mxu0 %v205
  %322 = vmatprep.subr.mxu0 %v202
  %323 = vmatpush2.msra.mxu0 %v201
  %324 = vmatprep.subr.mxu0 %v198
  %325 = vmatpush2.msra.mxu0 %v197
  %326 = vmatprep.subr.mxu0 %v194
  %327 = vmatpush2.msra.mxu0 %v193
  %328 = vmatprep.subr.mxu0 %v190
  %329 = vmatpush2.msra.mxu0 %v189
  %330 = vmatprep.mubr.f32.mxu0 %v249
  %331 = vmatmul.mubr.f32.gmra.mxu0 %v238
  %v332 = vpop.f32.mrf.mxu0
  %v333 = vadd.f32 0.0, %v332
  %v334 = vpop.f32.mrf.mxu0
  %v335 = vadd.f32 0.0, %v334
  %336 = vmatprep.mubr.f32.mxu0 %v251
  %337 = vmatmul.mubr.f32.gmra.mxu0 %v243
  %v338 = vpop.f32.mrf.mxu0
  %v339 = vadd.f32 0.0, %v338
  %v340 = vpop.f32.mrf.mxu0
  %v341 = vadd.f32 0.0, %v340
  %342 = vdwg.mxu0
  %343 = vmatprep.subr.mxu0 %v188
  %344 = vmatpush1.msra.mxu0 %v187
  %345 = vmatprep.subr.mxu0 %v184
  %346 = vmatpush1.msra.mxu0 %v183
  %347 = vmatprep.subr.mxu0 %v180
  %348 = vmatpush1.msra.mxu0 %v179
  %349 = vmatprep.subr.mxu0 %v176
  %350 = vmatpush1.msra.mxu0 %v175
  %351 = vmatprep.subr.mxu0 %v172
  %352 = vmatpush1.msra.mxu0 %v171
  %353 = vmatprep.subr.mxu0 %v168
  %354 = vmatpush1.msra.mxu0 %v167
  %355 = vmatprep.subr.mxu0 %v164
  %356 = vmatpush1.msra.mxu0 %v163
  %357 = vmatprep.subr.mxu0 %v160
  %358 = vmatpush1.msra.mxu0 %v159
  %359 = vmatprep.subr.mxu0 %v156
  %360 = vmatpush1.msra.mxu0 %v155
  %361 = vmatprep.subr.mxu0 %v152
  %362 = vmatpush1.msra.mxu0 %v151
  %363 = vmatprep.subr.mxu0 %v148
  %364 = vmatpush1.msra.mxu0 %v147
  %365 = vmatprep.subr.mxu0 %v144
  %366 = vmatpush1.msra.mxu0 %v143
  %367 = vmatprep.subr.mxu0 %v140
  %368 = vmatpush1.msra.mxu0 %v139
  %369 = vmatprep.subr.mxu0 %v136
  %370 = vmatpush1.msra.mxu0 %v135
  %371 = vmatprep.subr.mxu0 %v132
  %372 = vmatpush1.msra.mxu0 %v131
  %373 = vmatprep.subr.mxu0 %v128
  %374 = vmatpush1.msra.mxu0 %v127
  %375 = vmatprep.subr.mxu0 0.0
  %376 = vmatpush2.msra.mxu0 0.0
  %377 = vmatprep.subr.mxu0 0.0
  %378 = vmatpush2.msra.mxu0 0.0
  %379 = vmatprep.subr.mxu0 0.0
  %380 = vmatpush2.msra.mxu0 0.0
  %381 = vmatprep.subr.mxu0 0.0
  %382 = vmatpush2.msra.mxu0 0.0
  %383 = vmatprep.subr.mxu0 0.0
  %384 = vmatpush2.msra.mxu0 0.0
  %385 = vmatprep.subr.mxu0 0.0
  %386 = vmatpush2.msra.mxu0 0.0
  %387 = vmatprep.subr.mxu0 0.0
  %388 = vmatpush2.msra.mxu0 0.0
  %389 = vmatprep.subr.mxu0 %v264
  %390 = vmatpush2.msra.mxu0 %v261
  %391 = vmatprep.subr.mxu0 %v220
  %392 = vmatpush2.msra.mxu0 %v219
  %393 = vmatprep.subr.mxu0 %v216
  %394 = vmatpush2.msra.mxu0 %v215
  %395 = vmatprep.subr.mxu0 %v212
  %396 = vmatpush2.msra.mxu0 %v211
  %397 = vmatprep.subr.mxu0 %v208
  %398 = vmatpush2.msra.mxu0 %v207
  %399 = vmatprep.subr.mxu0 %v204
  %400 = vmatpush2.msra.mxu0 %v203
  %401 = vmatprep.subr.mxu0 %v200
  %402 = vmatpush2.msra.mxu0 %v199
  %403 = vmatprep.subr.mxu0 %v196
  %404 = vmatpush2.msra.mxu0 %v195
  %405 = vmatprep.subr.mxu0 %v192
  %406 = vmatpush2.msra.mxu0 %v191
  %407 = vmatprep.mubr.f32.mxu0 %v249
  %408 = vmatmul.mubr.f32.gmra.mxu0 %v238
  %v409 = vpop.f32.mrf.mxu0
  %v410 = vadd.f32 0.0, %v409
  %v411 = vpop.f32.mrf.mxu0
  %v412 = vadd.f32 0.0, %v411
  %413 = vmatprep.mubr.f32.mxu0 %v251
  %414 = vmatmul.mubr.f32.gmra.mxu0 %v243
  %v415 = vpop.f32.mrf.mxu0
  %v416 = vadd.f32 0.0, %v415
  %v417 = vpop.f32.mrf.mxu0
  %v418 = vadd.f32 0.0, %v417
  %419 = vdwg.mxu0
  %v421 = vsel %vm248, %v115, 0
  %v423 = vsel %vm248, %v117, 0
  %v426 = vsel %vm253, %v110, 0
  %v429 = vsel %vm253, %v111, 0
  %v432 = vsel %vm253, %v112, 0
  %v435 = vsel %vm253, %v113, 0
  %437 = vmatprep.subr.mxu0 %v75
  %438 = vmatpush1.msra.mxu0 %v74
  %439 = vmatprep.subr.mxu0 %v71
  %440 = vmatpush1.msra.mxu0 %v70
  %441 = vmatprep.subr.mxu0 %v67
  %442 = vmatpush1.msra.mxu0 %v66
  %443 = vmatprep.subr.mxu0 %v63
  %444 = vmatpush1.msra.mxu0 %v62
  %445 = vmatprep.subr.mxu0 %v59
  %446 = vmatpush1.msra.mxu0 %v58
  %447 = vmatprep.subr.mxu0 %v55
  %448 = vmatpush1.msra.mxu0 %v54
  %449 = vmatprep.subr.mxu0 %v51
  %450 = vmatpush1.msra.mxu0 %v50
  %451 = vmatprep.subr.mxu0 %v47
  %452 = vmatpush1.msra.mxu0 %v46
  %453 = vmatprep.subr.mxu0 %v43
  %454 = vmatpush1.msra.mxu0 %v42
  %455 = vmatprep.subr.mxu0 %v39
  %456 = vmatpush1.msra.mxu0 %v38
  %457 = vmatprep.subr.mxu0 %v35
  %458 = vmatpush1.msra.mxu0 %v34
  %459 = vmatprep.subr.mxu0 %v31
  %460 = vmatpush1.msra.mxu0 %v30
  %461 = vmatprep.subr.mxu0 %v27
  %462 = vmatpush1.msra.mxu0 %v26
  %463 = vmatprep.subr.mxu0 %v23
  %464 = vmatpush1.msra.mxu0 %v22
  %465 = vmatprep.subr.mxu0 %v19
  %466 = vmatpush1.msra.mxu0 %v18
  %467 = vmatprep.subr.mxu0 %v15
  %468 = vmatpush1.msra.mxu0 %v14
  %469 = vmatprep.subr.mxu0 0.0
  %470 = vmatpush2.msra.mxu0 0.0
  %471 = vmatprep.subr.mxu0 0.0
  %472 = vmatpush2.msra.mxu0 0.0
  %473 = vmatprep.subr.mxu0 0.0
  %474 = vmatpush2.msra.mxu0 0.0
  %475 = vmatprep.subr.mxu0 0.0
  %476 = vmatpush2.msra.mxu0 0.0
  %477 = vmatprep.subr.mxu0 0.0
  %478 = vmatpush2.msra.mxu0 0.0
  %479 = vmatprep.subr.mxu0 0.0
  %480 = vmatpush2.msra.mxu0 0.0
  %481 = vmatprep.subr.mxu0 0.0
  %482 = vmatpush2.msra.mxu0 0.0
  %483 = vmatprep.subr.mxu0 %v429
  %484 = vmatpush2.msra.mxu0 %v426
  %485 = vmatprep.subr.mxu0 %v107
  %486 = vmatpush2.msra.mxu0 %v106
  %487 = vmatprep.subr.mxu0 %v103
  %488 = vmatpush2.msra.mxu0 %v102
  %489 = vmatprep.subr.mxu0 %v99
  %490 = vmatpush2.msra.mxu0 %v98
  %491 = vmatprep.subr.mxu0 %v95
  %492 = vmatpush2.msra.mxu0 %v94
  %493 = vmatprep.subr.mxu0 %v91
  %494 = vmatpush2.msra.mxu0 %v90
  %495 = vmatprep.subr.mxu0 %v87
  %496 = vmatpush2.msra.mxu0 %v86
  %497 = vmatprep.subr.mxu0 %v83
  %498 = vmatpush2.msra.mxu0 %v82
  %499 = vmatprep.subr.mxu0 %v79
  %500 = vmatpush2.msra.mxu0 %v78
  %501 = vmatprep.mubr.f32.mxu0 %v421
  %502 = vmatmul.mubr.f32.gmra.mxu0 %v114
  %v503 = vpop.f32.mrf.mxu0
  %v504 = vadd.f32 %v333, %v503
  %v505 = vpop.f32.mrf.mxu0
  %v506 = vadd.f32 %v335, %v505
  %507 = vmatprep.mubr.f32.mxu0 %v423
  %508 = vmatmul.mubr.f32.gmra.mxu0 %v116
  %v509 = vpop.f32.mrf.mxu0
  %v510 = vadd.f32 %v339, %v509
  %v511 = vpop.f32.mrf.mxu0
  %v512 = vadd.f32 %v341, %v511
  %513 = vdwg.mxu0
  %514 = vmatprep.subr.mxu0 %v77
  %515 = vmatpush1.msra.mxu0 %v76
  %516 = vmatprep.subr.mxu0 %v73
  %517 = vmatpush1.msra.mxu0 %v72
  %518 = vmatprep.subr.mxu0 %v69
  %519 = vmatpush1.msra.mxu0 %v68
  %520 = vmatprep.subr.mxu0 %v65
  %521 = vmatpush1.msra.mxu0 %v64
  %522 = vmatprep.subr.mxu0 %v61
  %523 = vmatpush1.msra.mxu0 %v60
  %524 = vmatprep.subr.mxu0 %v57
  %525 = vmatpush1.msra.mxu0 %v56
  %526 = vmatprep.subr.mxu0 %v53
  %527 = vmatpush1.msra.mxu0 %v52
  %528 = vmatprep.subr.mxu0 %v49
  %529 = vmatpush1.msra.mxu0 %v48
  %530 = vmatprep.subr.mxu0 %v45
  %531 = vmatpush1.msra.mxu0 %v44
  %532 = vmatprep.subr.mxu0 %v41
  %533 = vmatpush1.msra.mxu0 %v40
  %534 = vmatprep.subr.mxu0 %v37
  %535 = vmatpush1.msra.mxu0 %v36
  %536 = vmatprep.subr.mxu0 %v33
  %537 = vmatpush1.msra.mxu0 %v32
  %538 = vmatprep.subr.mxu0 %v29
  %539 = vmatpush1.msra.mxu0 %v28
  %540 = vmatprep.subr.mxu0 %v25
  %541 = vmatpush1.msra.mxu0 %v24
  %542 = vmatprep.subr.mxu0 %v21
  %543 = vmatpush1.msra.mxu0 %v20
  %544 = vmatprep.subr.mxu0 %v17
  %545 = vmatpush1.msra.mxu0 %v16
  %546 = vmatprep.subr.mxu0 0.0
  %547 = vmatpush2.msra.mxu0 0.0
  %548 = vmatprep.subr.mxu0 0.0
  %549 = vmatpush2.msra.mxu0 0.0
  %550 = vmatprep.subr.mxu0 0.0
  %551 = vmatpush2.msra.mxu0 0.0
  %552 = vmatprep.subr.mxu0 0.0
  %553 = vmatpush2.msra.mxu0 0.0
  %554 = vmatprep.subr.mxu0 0.0
  %555 = vmatpush2.msra.mxu0 0.0
  %556 = vmatprep.subr.mxu0 0.0
  %557 = vmatpush2.msra.mxu0 0.0
  %558 = vmatprep.subr.mxu0 0.0
  %559 = vmatpush2.msra.mxu0 0.0
  %560 = vmatprep.subr.mxu0 %v435
  %561 = vmatpush2.msra.mxu0 %v432
  %562 = vmatprep.subr.mxu0 %v109
  %563 = vmatpush2.msra.mxu0 %v108
  %564 = vmatprep.subr.mxu0 %v105
  %565 = vmatpush2.msra.mxu0 %v104
  %566 = vmatprep.subr.mxu0 %v101
  %567 = vmatpush2.msra.mxu0 %v100
  %568 = vmatprep.subr.mxu0 %v97
  %569 = vmatpush2.msra.mxu0 %v96
  %570 = vmatprep.subr.mxu0 %v93
  %571 = vmatpush2.msra.mxu0 %v92
  %572 = vmatprep.subr.mxu0 %v89
  %573 = vmatpush2.msra.mxu0 %v88
  %574 = vmatprep.subr.mxu0 %v85
  %575 = vmatpush2.msra.mxu0 %v84
  %576 = vmatprep.subr.mxu0 %v81
  %577 = vmatpush2.msra.mxu0 %v80
  %578 = vmatprep.mubr.f32.mxu0 %v421
  %579 = vmatmul.mubr.f32.gmra.mxu0 %v114
  %v580 = vpop.f32.mrf.mxu0
  %v581 = vadd.f32 %v410, %v580
  %v582 = vpop.f32.mrf.mxu0
  %v583 = vadd.f32 %v412, %v582
  %584 = vmatprep.mubr.f32.mxu0 %v423
  %585 = vmatmul.mubr.f32.gmra.mxu0 %v116
  %v586 = vpop.f32.mrf.mxu0
  %v587 = vadd.f32 %v416, %v586
  %v588 = vpop.f32.mrf.mxu0
  %v589 = vadd.f32 %v418, %v588
  %590 = vdwg.mxu0
  %v591 = vld [vmem:[%s0 + $0x20] sm:$0xe0]
  %v592 = vld [vmem:[%s0 + $0x28] sm:$0xe0]
  %v593 = vld [vmem:[%s0 + $0x40] sm:$0x1f]
  %v594 = vld [vmem:[%s0 + $0x48] sm:$0x1f]
  %vm601 = vcmask 1042432
  %v602 = vrot.slane %v591, 5
  %v603 = vrot.slane %v120, 5
  %v604 = vsel %vm601, %v602, %v603
  %v605 = vrot.slane %v592, 5
  %v606 = vrot.slane %v121, 5
  %v607 = vsel %vm601, %v605, %v606
  %v608 = vrot.slane %v593, 5
  %v609 = vsel %vm601, %v603, %v608
  %v610 = vrot.slane %v594, 5
  %v611 = vsel %vm601, %v606, %v610
  %v614 = vsel %vm248, %v607, 0
  %v616 = vsel %vm248, %v611, 0
  %618 = vmatprep.subr.mxu0 %v186
  %619 = vmatpush1.msra.mxu0 %v185
  %620 = vmatprep.subr.mxu0 %v182
  %621 = vmatpush1.msra.mxu0 %v181
  %622 = vmatprep.subr.mxu0 %v178
  %623 = vmatpush1.msra.mxu0 %v177
  %624 = vmatprep.subr.mxu0 %v174
  %625 = vmatpush1.msra.mxu0 %v173
  %626 = vmatprep.subr.mxu0 %v170
  %627 = vmatpush1.msra.mxu0 %v169
  %628 = vmatprep.subr.mxu0 %v166
  %629 = vmatpush1.msra.mxu0 %v165
  %630 = vmatprep.subr.mxu0 %v162
  %631 = vmatpush1.msra.mxu0 %v161
  %632 = vmatprep.subr.mxu0 %v158
  %633 = vmatpush1.msra.mxu0 %v157
  %634 = vmatprep.subr.mxu0 %v154
  %635 = vmatpush1.msra.mxu0 %v153
  %636 = vmatprep.subr.mxu0 %v150
  %637 = vmatpush1.msra.mxu0 %v149
  %638 = vmatprep.subr.mxu0 %v146
  %639 = vmatpush1.msra.mxu0 %v145
  %640 = vmatprep.subr.mxu0 %v142
  %641 = vmatpush1.msra.mxu0 %v141
  %642 = vmatprep.subr.mxu0 %v138
  %643 = vmatpush1.msra.mxu0 %v137
  %644 = vmatprep.subr.mxu0 %v134
  %645 = vmatpush1.msra.mxu0 %v133
  %646 = vmatprep.subr.mxu0 %v130
  %647 = vmatpush1.msra.mxu0 %v129
  %648 = vmatprep.subr.mxu0 %v126
  %649 = vmatpush1.msra.mxu0 %v125
  %650 = vmatprep.subr.mxu0 0.0
  %651 = vmatpush2.msra.mxu0 0.0
  %652 = vmatprep.subr.mxu0 0.0
  %653 = vmatpush2.msra.mxu0 0.0
  %654 = vmatprep.subr.mxu0 0.0
  %655 = vmatpush2.msra.mxu0 0.0
  %656 = vmatprep.subr.mxu0 0.0
  %657 = vmatpush2.msra.mxu0 0.0
  %658 = vmatprep.subr.mxu0 0.0
  %659 = vmatpush2.msra.mxu0 0.0
  %660 = vmatprep.subr.mxu0 0.0
  %661 = vmatpush2.msra.mxu0 0.0
  %662 = vmatprep.subr.mxu0 0.0
  %663 = vmatpush2.msra.mxu0 0.0
  %664 = vmatprep.subr.mxu0 %v258
  %665 = vmatpush2.msra.mxu0 %v255
  %666 = vmatprep.subr.mxu0 %v218
  %667 = vmatpush2.msra.mxu0 %v217
  %668 = vmatprep.subr.mxu0 %v214
  %669 = vmatpush2.msra.mxu0 %v213
  %670 = vmatprep.subr.mxu0 %v210
  %671 = vmatpush2.msra.mxu0 %v209
  %672 = vmatprep.subr.mxu0 %v206
  %673 = vmatpush2.msra.mxu0 %v205
  %674 = vmatprep.subr.mxu0 %v202
  %675 = vmatpush2.msra.mxu0 %v201
  %676 = vmatprep.subr.mxu0 %v198
  %677 = vmatpush2.msra.mxu0 %v197
  %678 = vmatprep.subr.mxu0 %v194
  %679 = vmatpush2.msra.mxu0 %v193
  %680 = vmatprep.subr.mxu0 %v190
  %681 = vmatpush2.msra.mxu0 %v189
  %682 = vmatprep.mubr.f32.mxu0 %v614
  %683 = vmatmul.mubr.f32.gmra.mxu0 %v604
  %v684 = vpop.f32.mrf.mxu0
  %v685 = vadd.f32 0.0, %v684
  %v686 = vpop.f32.mrf.mxu0
  %v687 = vadd.f32 0.0, %v686
  %688 = vmatprep.mubr.f32.mxu0 %v616
  %689 = vmatmul.mubr.f32.gmra.mxu0 %v609
  %v690 = vpop.f32.mrf.mxu0
  %v691 = vadd.f32 0.0, %v690
  %v692 = vpop.f32.mrf.mxu0
  %v693 = vadd.f32 0.0, %v692
  %694 = vdwg.mxu0
  %695 = vmatprep.subr.mxu0 %v188
  %696 = vmatpush1.msra.mxu0 %v187
  %697 = vmatprep.subr.mxu0 %v184
  %698 = vmatpush1.msra.mxu0 %v183
  %699 = vmatprep.subr.mxu0 %v180
  %700 = vmatpush1.msra.mxu0 %v179
  %701 = vmatprep.subr.mxu0 %v176
  %702 = vmatpush1.msra.mxu0 %v175
  %703 = vmatprep.subr.mxu0 %v172
  %704 = vmatpush1.msra.mxu0 %v171
  %705 = vmatprep.subr.mxu0 %v168
  %706 = vmatpush1.msra.mxu0 %v167
  %707 = vmatprep.subr.mxu0 %v164
  %708 = vmatpush1.msra.mxu0 %v163
  %709 = vmatprep.subr.mxu0 %v160
  %710 = vmatpush1.msra.mxu0 %v159
  %711 = vmatprep.subr.mxu0 %v156
  %712 = vmatpush1.msra.mxu0 %v155
  %713 = vmatprep.subr.mxu0 %v152
  %714 = vmatpush1.msra.mxu0 %v151
  %715 = vmatprep.subr.mxu0 %v148
  %716 = vmatpush1.msra.mxu0 %v147
  %717 = vmatprep.subr.mxu0 %v144
  %718 = vmatpush1.msra.mxu0 %v143
  %719 = vmatprep.subr.mxu0 %v140
  %720 = vmatpush1.msra.mxu0 %v139
  %721 = vmatprep.subr.mxu0 %v136
  %722 = vmatpush1.msra.mxu0 %v135
  %723 = vmatprep.subr.mxu0 %v132
  %724 = vmatpush1.msra.mxu0 %v131
  %725 = vmatprep.subr.mxu0 %v128
  %726 = vmatpush1.msra.mxu0 %v127
  %727 = vmatprep.subr.mxu0 0.0
  %728 = vmatpush2.msra.mxu0 0.0
  %729 = vmatprep.subr.mxu0 0.0
  %730 = vmatpush2.msra.mxu0 0.0
  %731 = vmatprep.subr.mxu0 0.0
  %732 = vmatpush2.msra.mxu0 0.0
  %733 = vmatprep.subr.mxu0 0.0
  %734 = vmatpush2.msra.mxu0 0.0
  %735 = vmatprep.subr.mxu0 0.0
  %736 = vmatpush2.msra.mxu0 0.0
  %737 = vmatprep.subr.mxu0 0.0
  %738 = vmatpush2.msra.mxu0 0.0
  %739 = vmatprep.subr.mxu0 0.0
  %740 = vmatpush2.msra.mxu0 0.0
  %741 = vmatprep.subr.mxu0 %v264
  %742 = vmatpush2.msra.mxu0 %v261
  %743 = vmatprep.subr.mxu0 %v220
  %744 = vmatpush2.msra.mxu0 %v219
  %745 = vmatprep.subr.mxu0 %v216
  %746 = vmatpush2.msra.mxu0 %v215
  %747 = vmatprep.subr.mxu0 %v212
  %748 = vmatpush2.msra.mxu0 %v211
  %749 = vmatprep.subr.mxu0 %v208
  %750 = vmatpush2.msra.mxu0 %v207
  %751 = vmatprep.subr.mxu0 %v204
  %752 = vmatpush2.msra.mxu0 %v203
  %753 = vmatprep.subr.mxu0 %v200
  %754 = vmatpush2.msra.mxu0 %v199
  %755 = vmatprep.subr.mxu0 %v196
  %756 = vmatpush2.msra.mxu0 %v195
  %757 = vmatprep.subr.mxu0 %v192
  %758 = vmatpush2.msra.mxu0 %v191
  %759 = vmatprep.mubr.f32.mxu0 %v614
  %760 = vmatmul.mubr.f32.gmra.mxu0 %v604
  %v761 = vpop.f32.mrf.mxu0
  %v762 = vadd.f32 0.0, %v761
  %v763 = vpop.f32.mrf.mxu0
  %v764 = vadd.f32 0.0, %v763
  %765 = vmatprep.mubr.f32.mxu0 %v616
  %766 = vmatmul.mubr.f32.gmra.mxu0 %v609
  %v767 = vpop.f32.mrf.mxu0
  %v768 = vadd.f32 0.0, %v767
  %v769 = vpop.f32.mrf.mxu0
  %v770 = vadd.f32 0.0, %v769
  %771 = vdwg.mxu0
  %v776 = vrot.slane %v118, 4
  %v777 = vrot.slane %v120, 4
  %v778 = vsel %vm253, %v776, %v777
  %v779 = vrot.slane %v119, 4
  %v780 = vrot.slane %v121, 4
  %v781 = vsel %vm253, %v779, %v780
  %v782 = vrot.slane %v122, 4
  %v783 = vsel %vm253, %v777, %v782
  %v784 = vrot.slane %v123, 4
  %v785 = vsel %vm253, %v780, %v784
  %v788 = vsel %vm248, %v781, 0
  %v790 = vsel %vm248, %v785, 0
  %792 = vmatprep.subr.mxu0 %v75
  %793 = vmatpush1.msra.mxu0 %v74
  %794 = vmatprep.subr.mxu0 %v71
  %795 = vmatpush1.msra.mxu0 %v70
  %796 = vmatprep.subr.mxu0 %v67
  %797 = vmatpush1.msra.mxu0 %v66
  %798 = vmatprep.subr.mxu0 %v63
  %799 = vmatpush1.msra.mxu0 %v62
  %800 = vmatprep.subr.mxu0 %v59
  %801 = vmatpush1.msra.mxu0 %v58
  %802 = vmatprep.subr.mxu0 %v55
  %803 = vmatpush1.msra.mxu0 %v54
  %804 = vmatprep.subr.mxu0 %v51
  %805 = vmatpush1.msra.mxu0 %v50
  %806 = vmatprep.subr.mxu0 %v47
  %807 = vmatpush1.msra.mxu0 %v46
  %808 = vmatprep.subr.mxu0 %v43
  %809 = vmatpush1.msra.mxu0 %v42
  %810 = vmatprep.subr.mxu0 %v39
  %811 = vmatpush1.msra.mxu0 %v38
  %812 = vmatprep.subr.mxu0 %v35
  %813 = vmatpush1.msra.mxu0 %v34
  %814 = vmatprep.subr.mxu0 %v31
  %815 = vmatpush1.msra.mxu0 %v30
  %816 = vmatprep.subr.mxu0 %v27
  %817 = vmatpush1.msra.mxu0 %v26
  %818 = vmatprep.subr.mxu0 %v23
  %819 = vmatpush1.msra.mxu0 %v22
  %820 = vmatprep.subr.mxu0 %v19
  %821 = vmatpush1.msra.mxu0 %v18
  %822 = vmatprep.subr.mxu0 %v15
  %823 = vmatpush1.msra.mxu0 %v14
  %824 = vmatprep.subr.mxu0 0.0
  %825 = vmatpush2.msra.mxu0 0.0
  %826 = vmatprep.subr.mxu0 0.0
  %827 = vmatpush2.msra.mxu0 0.0
  %828 = vmatprep.subr.mxu0 0.0
  %829 = vmatpush2.msra.mxu0 0.0
  %830 = vmatprep.subr.mxu0 0.0
  %831 = vmatpush2.msra.mxu0 0.0
  %832 = vmatprep.subr.mxu0 0.0
  %833 = vmatpush2.msra.mxu0 0.0
  %834 = vmatprep.subr.mxu0 0.0
  %835 = vmatpush2.msra.mxu0 0.0
  %836 = vmatprep.subr.mxu0 0.0
  %837 = vmatpush2.msra.mxu0 0.0
  %838 = vmatprep.subr.mxu0 %v429
  %839 = vmatpush2.msra.mxu0 %v426
  %840 = vmatprep.subr.mxu0 %v107
  %841 = vmatpush2.msra.mxu0 %v106
  %842 = vmatprep.subr.mxu0 %v103
  %843 = vmatpush2.msra.mxu0 %v102
  %844 = vmatprep.subr.mxu0 %v99
  %845 = vmatpush2.msra.mxu0 %v98
  %846 = vmatprep.subr.mxu0 %v95
  %847 = vmatpush2.msra.mxu0 %v94
  %848 = vmatprep.subr.mxu0 %v91
  %849 = vmatpush2.msra.mxu0 %v90
  %850 = vmatprep.subr.mxu0 %v87
  %851 = vmatpush2.msra.mxu0 %v86
  %852 = vmatprep.subr.mxu0 %v83
  %853 = vmatpush2.msra.mxu0 %v82
  %854 = vmatprep.subr.mxu0 %v79
  %855 = vmatpush2.msra.mxu0 %v78
  %856 = vmatprep.mubr.f32.mxu0 %v788
  %857 = vmatmul.mubr.f32.gmra.mxu0 %v778
  %v858 = vpop.f32.mrf.mxu0
  %v859 = vadd.f32 %v685, %v858
  %v860 = vpop.f32.mrf.mxu0
  %v861 = vadd.f32 %v687, %v860
  %862 = vmatprep.mubr.f32.mxu0 %v790
  %863 = vmatmul.mubr.f32.gmra.mxu0 %v783
  %v864 = vpop.f32.mrf.mxu0
  %v865 = vadd.f32 %v691, %v864
  %v866 = vpop.f32.mrf.mxu0
  %v867 = vadd.f32 %v693, %v866
  %868 = vdwg.mxu0
  %869 = vmatprep.subr.mxu0 %v77
  %870 = vmatpush1.msra.mxu0 %v76
  %871 = vmatprep.subr.mxu0 %v73
  %872 = vmatpush1.msra.mxu0 %v72
  %873 = vmatprep.subr.mxu0 %v69
  %874 = vmatpush1.msra.mxu0 %v68
  %875 = vmatprep.subr.mxu0 %v65
  %876 = vmatpush1.msra.mxu0 %v64
  %877 = vmatprep.subr.mxu0 %v61
  %878 = vmatpush1.msra.mxu0 %v60
  %879 = vmatprep.subr.mxu0 %v57
  %880 = vmatpush1.msra.mxu0 %v56
  %881 = vmatprep.subr.mxu0 %v53
  %882 = vmatpush1.msra.mxu0 %v52
  %883 = vmatprep.subr.mxu0 %v49
  %884 = vmatpush1.msra.mxu0 %v48
  %885 = vmatprep.subr.mxu0 %v45
  %886 = vmatpush1.msra.mxu0 %v44
  %887 = vmatprep.subr.mxu0 %v41
  %888 = vmatpush1.msra.mxu0 %v40
  %889 = vmatprep.subr.mxu0 %v37
  %890 = vmatpush1.msra.mxu0 %v36
  %891 = vmatprep.subr.mxu0 %v33
  %892 = vmatpush1.msra.mxu0 %v32
  %893 = vmatprep.subr.mxu0 %v29
  %894 = vmatpush1.msra.mxu0 %v28
  %895 = vmatprep.subr.mxu0 %v25
  %896 = vmatpush1.msra.mxu0 %v24
  %897 = vmatprep.subr.mxu0 %v21
  %898 = vmatpush1.msra.mxu0 %v20
  %899 = vmatprep.subr.mxu0 %v17
  %900 = vmatpush1.msra.mxu0 %v16
  %901 = vmatprep.subr.mxu0 0.0
  %902 = vmatpush2.msra.mxu0 0.0
  %903 = vmatprep.subr.mxu0 0.0
  %904 = vmatpush2.msra.mxu0 0.0
  %905 = vmatprep.subr.mxu0 0.0
  %906 = vmatpush2.msra.mxu0 0.0
  %907 = vmatprep.subr.mxu0 0.0
  %908 = vmatpush2.msra.mxu0 0.0
  %909 = vmatprep.subr.mxu0 0.0
  %910 = vmatpush2.msra.mxu0 0.0
  %911 = vmatprep.subr.mxu0 0.0
  %912 = vmatpush2.msra.mxu0 0.0
  %913 = vmatprep.subr.mxu0 0.0
  %914 = vmatpush2.msra.mxu0 0.0
  %915 = vmatprep.subr.mxu0 %v435
  %916 = vmatpush2.msra.mxu0 %v432
  %917 = vmatprep.subr.mxu0 %v109
  %918 = vmatpush2.msra.mxu0 %v108
  %919 = vmatprep.subr.mxu0 %v105
  %920 = vmatpush2.msra.mxu0 %v104
  %921 = vmatprep.subr.mxu0 %v101
  %922 = vmatpush2.msra.mxu0 %v100
  %923 = vmatprep.subr.mxu0 %v97
  %924 = vmatpush2.msra.mxu0 %v96
  %925 = vmatprep.subr.mxu0 %v93
  %926 = vmatpush2.msra.mxu0 %v92
  %927 = vmatprep.subr.mxu0 %v89
  %928 = vmatpush2.msra.mxu0 %v88
  %929 = vmatprep.subr.mxu0 %v85
  %930 = vmatpush2.msra.mxu0 %v84
  %931 = vmatprep.subr.mxu0 %v81
  %932 = vmatpush2.msra.mxu0 %v80
  %933 = vmatprep.mubr.f32.mxu0 %v788
  %934 = vmatmul.mubr.f32.gmra.mxu0 %v778
  %v935 = vpop.f32.mrf.mxu0
  %v936 = vadd.f32 %v762, %v935
  %v937 = vpop.f32.mrf.mxu0
  %v938 = vadd.f32 %v764, %v937
  %939 = vmatprep.mubr.f32.mxu0 %v790
  %940 = vmatmul.mubr.f32.gmra.mxu0 %v783
  %v941 = vpop.f32.mrf.mxu0
  %v942 = vadd.f32 %v768, %v941
  %v943 = vpop.f32.mrf.mxu0
  %v944 = vadd.f32 %v770, %v943
  %945 = vdwg.mxu0
  %s946 = scalar_lea.vmem %s1, 1600
  %v947 = vld [vmem:[%s946] sm:$0xff]
  %v948 = vld [vmem:[%s946 + $0x8] sm:$0xff]
  %v949 = vld [vmem:[%s946 + $0x10] sm:$0xff]
  %v950 = vld [vmem:[%s946 + $0x18] sm:$0xff]
  %v951 = vld [vmem:[%s946 + $0x20] sm:$0xff]
  %v952 = vld [vmem:[%s946 + $0x28] sm:$0xff]
  %v953 = vld [vmem:[%s946 + $0x30] sm:$0xff]
  %v954 = vld [vmem:[%s946 + $0x38] sm:$0xff]
  %v955 = vld [vmem:[%s946 + $0x40] sm:$0xff]
  %v956 = vld [vmem:[%s946 + $0x48] sm:$0xff]
  %v957 = vld [vmem:[%s946 + $0x50] sm:$0xff]
  %v958 = vld [vmem:[%s946 + $0x58] sm:$0xff]
  %v959 = vld [vmem:[%s946 + $0x60] sm:$0xff]
  %v960 = vld [vmem:[%s946 + $0x68] sm:$0xff]
  %v961 = vld [vmem:[%s946 + $0x70] sm:$0xff]
  %v962 = vld [vmem:[%s946 + $0x78] sm:$0xff]
  %v963 = vld [vmem:[%s946 + $0x80] sm:$0xff]
  %v964 = vld [vmem:[%s946 + $0x88] sm:$0xff]
  %v965 = vld [vmem:[%s946 + $0x90] sm:$0xff]
  %v966 = vld [vmem:[%s946 + $0x98] sm:$0xff]
  %v967 = vld [vmem:[%s946 + $0xa0] sm:$0xff]
  %v968 = vld [vmem:[%s946 + $0xa8] sm:$0xff]
  %v969 = vld [vmem:[%s946 + $0xb0] sm:$0xff]
  %v970 = vld [vmem:[%s946 + $0xb8] sm:$0xff]
  %v971 = vld [vmem:[%s946 + $0xc0] sm:$0xff]
  %v972 = vld [vmem:[%s946 + $0xc8] sm:$0xff]
  %v973 = vld [vmem:[%s946 + $0xd0] sm:$0xff]
  %v974 = vld [vmem:[%s946 + $0xd8] sm:$0xff]
  %v975 = vld [vmem:[%s946 + $0xe0] sm:$0xff]
  %v976 = vld [vmem:[%s946 + $0xe8] sm:$0xff]
  %v977 = vld [vmem:[%s946 + $0xf0] sm:$0xff]
  %v978 = vld [vmem:[%s946 + $0xf8] sm:$0xff]
  %v979 = vld [vmem:[%s946 + $0x100] sm:$0xff]
  %v980 = vld [vmem:[%s946 + $0x108] sm:$0xff]
  %v981 = vld [vmem:[%s946 + $0x110] sm:$0xff]
  %v982 = vld [vmem:[%s946 + $0x118] sm:$0xff]
  %v983 = vld [vmem:[%s946 + $0x120] sm:$0xff]
  %v984 = vld [vmem:[%s946 + $0x128] sm:$0xff]
  %v985 = vld [vmem:[%s946 + $0x130] sm:$0xff]
  %v986 = vld [vmem:[%s946 + $0x138] sm:$0xff]
  %v987 = vld [vmem:[%s946 + $0x140] sm:$0xff]
  %v988 = vld [vmem:[%s946 + $0x148] sm:$0xff]
  %v989 = vld [vmem:[%s946 + $0x150] sm:$0xff]
  %v990 = vld [vmem:[%s946 + $0x158] sm:$0xff]
  %v991 = vld [vmem:[%s946 + $0x160] sm:$0xff]
  %v992 = vld [vmem:[%s946 + $0x168] sm:$0xff]
  %v993 = vld [vmem:[%s946 + $0x170] sm:$0xff]
  %v994 = vld [vmem:[%s946 + $0x178] sm:$0xff]
  %v995 = vld [vmem:[%s946 + $0x180] sm:$0xff]
  %v996 = vld [vmem:[%s946 + $0x188] sm:$0xff]
  %v997 = vld [vmem:[%s946 + $0x190] sm:$0xff]
  %v998 = vld [vmem:[%s946 + $0x198] sm:$0xff]
  %v999 = vld [vmem:[%s946 + $0x1a0] sm:$0xff]
  %v1000 = vld [vmem:[%s946 + $0x1a8] sm:$0xff]
  %v1001 = vld [vmem:[%s946 + $0x1b0] sm:$0xff]
  %v1002 = vld [vmem:[%s946 + $0x1b8] sm:$0xff]
  %v1003 = vld [vmem:[%s946 + $0x1c0] sm:$0xff]
  %v1004 = vld [vmem:[%s946 + $0x1c8] sm:$0xff]
  %v1005 = vld [vmem:[%s946 + $0x1d0] sm:$0xff]
  %v1006 = vld [vmem:[%s946 + $0x1d8] sm:$0xff]
  %v1007 = vld [vmem:[%s946 + $0x1e0] sm:$0xff]
  %v1008 = vld [vmem:[%s946 + $0x1e8] sm:$0xff]
  %v1009 = vld [vmem:[%s946 + $0x1f0] sm:$0xff]
  %v1010 = vld [vmem:[%s946 + $0x1f8] sm:$0xff]
  %v1011 = vld [vmem:[%s946 + $0x200] sm:$0xff]
  %v1012 = vld [vmem:[%s946 + $0x208] sm:$0xff]
  %v1013 = vld [vmem:[%s946 + $0x210] sm:$0xff]
  %v1014 = vld [vmem:[%s946 + $0x218] sm:$0xff]
  %v1015 = vld [vmem:[%s946 + $0x220] sm:$0xff]
  %v1016 = vld [vmem:[%s946 + $0x228] sm:$0xff]
  %v1017 = vld [vmem:[%s946 + $0x230] sm:$0xff]
  %v1018 = vld [vmem:[%s946 + $0x238] sm:$0xff]
  %v1019 = vld [vmem:[%s946 + $0x240] sm:$0xff]
  %v1020 = vld [vmem:[%s946 + $0x248] sm:$0xff]
  %v1021 = vld [vmem:[%s946 + $0x250] sm:$0xff]
  %v1022 = vld [vmem:[%s946 + $0x258] sm:$0xff]
  %v1023 = vld [vmem:[%s946 + $0x260] sm:$0xff]
  %v1024 = vld [vmem:[%s946 + $0x268] sm:$0xff]
  %v1025 = vld [vmem:[%s946 + $0x270] sm:$0xff]
  %v1026 = vld [vmem:[%s946 + $0x278] sm:$0xff]
  %v1027 = vld [vmem:[%s946 + $0x280] sm:$0xff]
  %v1028 = vld [vmem:[%s946 + $0x288] sm:$0xff]
  %v1029 = vld [vmem:[%s946 + $0x290] sm:$0xff]
  %v1030 = vld [vmem:[%s946 + $0x298] sm:$0xff]
  %v1031 = vld [vmem:[%s946 + $0x2a0] sm:$0xff]
  %v1032 = vld [vmem:[%s946 + $0x2a8] sm:$0xff]
  %v1033 = vld [vmem:[%s946 + $0x2b0] sm:$0xff]
  %v1034 = vld [vmem:[%s946 + $0x2b8] sm:$0xff]
  %v1035 = vld [vmem:[%s946 + $0x2c0] sm:$0xff]
  %v1036 = vld [vmem:[%s946 + $0x2c8] sm:$0xff]
  %v1037 = vld [vmem:[%s946 + $0x2d0] sm:$0xff]
  %v1038 = vld [vmem:[%s946 + $0x2d8] sm:$0xff]
  %v1039 = vld [vmem:[%s946 + $0x2e0] sm:$0xff]
  %v1040 = vld [vmem:[%s946 + $0x2e8] sm:$0xff]
  %v1041 = vld [vmem:[%s946 + $0x2f0] sm:$0xff]
  %v1042 = vld [vmem:[%s946 + $0x2f8] sm:$0xff]
  %v1043 = vld [vmem:[%s946 + $0x300] sm:$0xf]
  %v1044 = vld [vmem:[%s946 + $0x308] sm:$0xf]
  %v1045 = vld [vmem:[%s946 + $0x310] sm:$0xf]
  %v1046 = vld [vmem:[%s946 + $0x318] sm:$0xf]
  %v1047 = vld [vmem:[%s0] sm:$0xfc]
  %v1048 = vld [vmem:[%s0 + $0x8] sm:$0xfc]
  %v1049 = vld [vmem:[%s0 + $0x20] sm:$0x3]
  %v1050 = vld [vmem:[%s0 + $0x28] sm:$0x3]
  %vm1055 = vcmask 1045504
  %v1056 = vrot.slane %v1047, 2
  %v1057 = vrot.slane %v116, 2
  %v1058 = vsel %vm1055, %v1056, %v1057
  %v1059 = vrot.slane %v1048, 2
  %v1060 = vrot.slane %v117, 2
  %v1061 = vsel %vm1055, %v1059, %v1060
  %v1062 = vrot.slane %v1049, 2
  %v1063 = vsel %vm1055, %v1057, %v1062
  %v1064 = vrot.slane %v1050, 2
  %v1065 = vsel %vm1055, %v1060, %v1064
  %v1068 = vsel %vm248, %v1061, 0
  %v1070 = vsel %vm248, %v1065, 0
  %v1073 = vsel %vm253, %v1043, 0
  %v1076 = vsel %vm253, %v1044, 0
  %v1079 = vsel %vm253, %v1045, 0
  %v1082 = vsel %vm253, %v1046, 0
  %1084 = vmatprep.subr.mxu0 %v1008
  %1085 = vmatpush1.msra.mxu0 %v1007
  %1086 = vmatprep.subr.mxu0 %v1004
  %1087 = vmatpush1.msra.mxu0 %v1003
  %1088 = vmatprep.subr.mxu0 %v1000
  %1089 = vmatpush1.msra.mxu0 %v999
  %1090 = vmatprep.subr.mxu0 %v996
  %1091 = vmatpush1.msra.mxu0 %v995
  %1092 = vmatprep.subr.mxu0 %v992
  %1093 = vmatpush1.msra.mxu0 %v991
  %1094 = vmatprep.subr.mxu0 %v988
  %1095 = vmatpush1.msra.mxu0 %v987
  %1096 = vmatprep.subr.mxu0 %v984
  %1097 = vmatpush1.msra.mxu0 %v983
  %1098 = vmatprep.subr.mxu0 %v980
  %1099 = vmatpush1.msra.mxu0 %v979
  %1100 = vmatprep.subr.mxu0 %v976
  %1101 = vmatpush1.msra.mxu0 %v975
  %1102 = vmatprep.subr.mxu0 %v972
  %1103 = vmatpush1.msra.mxu0 %v971
  %1104 = vmatprep.subr.mxu0 %v968
  %1105 = vmatpush1.msra.mxu0 %v967
  %1106 = vmatprep.subr.mxu0 %v964
  %1107 = vmatpush1.msra.mxu0 %v963
  %1108 = vmatprep.subr.mxu0 %v960
  %1109 = vmatpush1.msra.mxu0 %v959
  %1110 = vmatprep.subr.mxu0 %v956
  %1111 = vmatpush1.msra.mxu0 %v955
  %1112 = vmatprep.subr.mxu0 %v952
  %1113 = vmatpush1.msra.mxu0 %v951
  %1114 = vmatprep.subr.mxu0 %v948
  %1115 = vmatpush1.msra.mxu0 %v947
  %1116 = vmatprep.subr.mxu0 0.0
  %1117 = vmatpush2.msra.mxu0 0.0
  %1118 = vmatprep.subr.mxu0 0.0
  %1119 = vmatpush2.msra.mxu0 0.0
  %1120 = vmatprep.subr.mxu0 0.0
  %1121 = vmatpush2.msra.mxu0 0.0
  %1122 = vmatprep.subr.mxu0 0.0
  %1123 = vmatpush2.msra.mxu0 0.0
  %1124 = vmatprep.subr.mxu0 0.0
  %1125 = vmatpush2.msra.mxu0 0.0
  %1126 = vmatprep.subr.mxu0 0.0
  %1127 = vmatpush2.msra.mxu0 0.0
  %1128 = vmatprep.subr.mxu0 0.0
  %1129 = vmatpush2.msra.mxu0 0.0
  %1130 = vmatprep.subr.mxu0 %v1076
  %1131 = vmatpush2.msra.mxu0 %v1073
  %1132 = vmatprep.subr.mxu0 %v1040
  %1133 = vmatpush2.msra.mxu0 %v1039
  %1134 = vmatprep.subr.mxu0 %v1036
  %1135 = vmatpush2.msra.mxu0 %v1035
  %1136 = vmatprep.subr.mxu0 %v1032
  %1137 = vmatpush2.msra.mxu0 %v1031
  %1138 = vmatprep.subr.mxu0 %v1028
  %1139 = vmatpush2.msra.mxu0 %v1027
  %1140 = vmatprep.subr.mxu0 %v1024
  %1141 = vmatpush2.msra.mxu0 %v1023
  %1142 = vmatprep.subr.mxu0 %v1020
  %1143 = vmatpush2.msra.mxu0 %v1019
  %1144 = vmatprep.subr.mxu0 %v1016
  %1145 = vmatpush2.msra.mxu0 %v1015
  %1146 = vmatprep.subr.mxu0 %v1012
  %1147 = vmatpush2.msra.mxu0 %v1011
  %1148 = vmatprep.mubr.f32.mxu0 %v1068
  %1149 = vmatmul.mubr.f32.gmra.mxu0 %v1058
  %v1150 = vpop.f32.mrf.mxu0
  %v1151 = vadd.f32 0.0, %v1150
  %v1152 = vpop.f32.mrf.mxu0
  %v1153 = vadd.f32 0.0, %v1152
  %1154 = vmatprep.mubr.f32.mxu0 %v1070
  %1155 = vmatmul.mubr.f32.gmra.mxu0 %v1063
  %v1156 = vpop.f32.mrf.mxu0
  %v1157 = vadd.f32 0.0, %v1156
  %v1158 = vpop.f32.mrf.mxu0
  %v1159 = vadd.f32 0.0, %v1158
  %1160 = vdwg.mxu0
  %1161 = vmatprep.subr.mxu0 %v1010
  %1162 = vmatpush1.msra.mxu0 %v1009
  %1163 = vmatprep.subr.mxu0 %v1006
  %1164 = vmatpush1.msra.mxu0 %v1005
  %1165 = vmatprep.subr.mxu0 %v1002
  %1166 = vmatpush1.msra.mxu0 %v1001
  %1167 = vmatprep.subr.mxu0 %v998
  %1168 = vmatpush1.msra.mxu0 %v997
  %1169 = vmatprep.subr.mxu0 %v994
  %1170 = vmatpush1.msra.mxu0 %v993
  %1171 = vmatprep.subr.mxu0 %v990
  %1172 = vmatpush1.msra.mxu0 %v989
  %1173 = vmatprep.subr.mxu0 %v986
  %1174 = vmatpush1.msra.mxu0 %v985
  %1175 = vmatprep.subr.mxu0 %v982
  %1176 = vmatpush1.msra.mxu0 %v981
  %1177 = vmatprep.subr.mxu0 %v978
  %1178 = vmatpush1.msra.mxu0 %v977
  %1179 = vmatprep.subr.mxu0 %v974
  %1180 = vmatpush1.msra.mxu0 %v973
  %1181 = vmatprep.subr.mxu0 %v970
  %1182 = vmatpush1.msra.mxu0 %v969
  %1183 = vmatprep.subr.mxu0 %v966
  %1184 = vmatpush1.msra.mxu0 %v965
  %1185 = vmatprep.subr.mxu0 %v962
  %1186 = vmatpush1.msra.mxu0 %v961
  %1187 = vmatprep.subr.mxu0 %v958
  %1188 = vmatpush1.msra.mxu0 %v957
  %1189 = vmatprep.subr.mxu0 %v954
  %1190 = vmatpush1.msra.mxu0 %v953
  %1191 = vmatprep.subr.mxu0 %v950
  %1192 = vmatpush1.msra.mxu0 %v949
  %1193 = vmatprep.subr.mxu0 0.0
  %1194 = vmatpush2.msra.mxu0 0.0
  %1195 = vmatprep.subr.mxu0 0.0
  %1196 = vmatpush2.msra.mxu0 0.0
  %1197 = vmatprep.subr.mxu0 0.0
  %1198 = vmatpush2.msra.mxu0 0.0
  %1199 = vmatprep.subr.mxu0 0.0
  %1200 = vmatpush2.msra.mxu0 0.0
  %1201 = vmatprep.subr.mxu0 0.0
  %1202 = vmatpush2.msra.mxu0 0.0
  %1203 = vmatprep.subr.mxu0 0.0
  %1204 = vmatpush2.msra.mxu0 0.0
  %1205 = vmatprep.subr.mxu0 0.0
  %1206 = vmatpush2.msra.mxu0 0.0
  %1207 = vmatprep.subr.mxu0 %v1082
  %1208 = vmatpush2.msra.mxu0 %v1079
  %1209 = vmatprep.subr.mxu0 %v1042
  %1210 = vmatpush2.msra.mxu0 %v1041
  %1211 = vmatprep.subr.mxu0 %v1038
  %1212 = vmatpush2.msra.mxu0 %v1037
  %1213 = vmatprep.subr.mxu0 %v1034
  %1214 = vmatpush2.msra.mxu0 %v1033
  %1215 = vmatprep.subr.mxu0 %v1030
  %1216 = vmatpush2.msra.mxu0 %v1029
  %1217 = vmatprep.subr.mxu0 %v1026
  %1218 = vmatpush2.msra.mxu0 %v1025
  %1219 = vmatprep.subr.mxu0 %v1022
  %1220 = vmatpush2.msra.mxu0 %v1021
  %1221 = vmatprep.subr.mxu0 %v1018
  %1222 = vmatpush2.msra.mxu0 %v1017
  %1223 = vmatprep.subr.mxu0 %v1014
  %1224 = vmatpush2.msra.mxu0 %v1013
  %1225 = vmatprep.mubr.f32.mxu0 %v1068
  %1226 = vmatmul.mubr.f32.gmra.mxu0 %v1058
  %v1227 = vpop.f32.mrf.mxu0
  %v1228 = vadd.f32 0.0, %v1227
  %v1229 = vpop.f32.mrf.mxu0
  %v1230 = vadd.f32 0.0, %v1229
  %1231 = vmatprep.mubr.f32.mxu0 %v1070
  %1232 = vmatmul.mubr.f32.gmra.mxu0 %v1063
  %v1233 = vpop.f32.mrf.mxu0
  %v1234 = vadd.f32 0.0, %v1233
  %v1235 = vpop.f32.mrf.mxu0
  %v1236 = vadd.f32 0.0, %v1235
  %1237 = vdwg.mxu0
  %v1238 = vadd.f32 %v504, %v1151
  %v1239 = vadd.f32 %v506, %v1153
  %v1240 = vadd.f32 %v581, %v1228
  %v1241 = vadd.f32 %v583, %v1230
  %v1242 = vadd.f32 %v510, %v1157
  %v1243 = vadd.f32 %v512, %v1159
  %v1244 = vadd.f32 %v587, %v1234
  %v1245 = vadd.f32 %v589, %v1236
  %v1246 = vld [vmem:[%s0 + $0x20] sm:$0xc0]
  %v1247 = vld [vmem:[%s0 + $0x28] sm:$0xc0]
  %v1248 = vld [vmem:[%s0 + $0x40] sm:$0x3f]
  %v1249 = vld [vmem:[%s0 + $0x48] sm:$0x3f]
  %vm1254 = vcmask 1041408
  %v1255 = vrot.slane %v1246, 6
  %v1256 = vrot.slane %v120, 6
  %v1257 = vsel %vm1254, %v1255, %v1256
  %v1258 = vrot.slane %v1247, 6
  %v1259 = vrot.slane %v121, 6
  %v1260 = vsel %vm1254, %v1258, %v1259
  %v1261 = vrot.slane %v1248, 6
  %v1262 = vsel %vm1254, %v1256, %v1261
  %v1263 = vrot.slane %v1249, 6
  %v1264 = vsel %vm1254, %v1259, %v1263
  %v1267 = vsel %vm248, %v1260, 0
  %v1269 = vsel %vm248, %v1264, 0
  %1271 = vmatprep.subr.mxu0 %v1008
  %1272 = vmatpush1.msra.mxu0 %v1007
  %1273 = vmatprep.subr.mxu0 %v1004
  %1274 = vmatpush1.msra.mxu0 %v1003
  %1275 = vmatprep.subr.mxu0 %v1000
  %1276 = vmatpush1.msra.mxu0 %v999
  %1277 = vmatprep.subr.mxu0 %v996
  %1278 = vmatpush1.msra.mxu0 %v995
  %1279 = vmatprep.subr.mxu0 %v992
  %1280 = vmatpush1.msra.mxu0 %v991
  %1281 = vmatprep.subr.mxu0 %v988
  %1282 = vmatpush1.msra.mxu0 %v987
  %1283 = vmatprep.subr.mxu0 %v984
  %1284 = vmatpush1.msra.mxu0 %v983
  %1285 = vmatprep.subr.mxu0 %v980
  %1286 = vmatpush1.msra.mxu0 %v979
  %1287 = vmatprep.subr.mxu0 %v976
  %1288 = vmatpush1.msra.mxu0 %v975
  %1289 = vmatprep.subr.mxu0 %v972
  %1290 = vmatpush1.msra.mxu0 %v971
  %1291 = vmatprep.subr.mxu0 %v968
  %1292 = vmatpush1.msra.mxu0 %v967
  %1293 = vmatprep.subr.mxu0 %v964
  %1294 = vmatpush1.msra.mxu0 %v963
  %1295 = vmatprep.subr.mxu0 %v960
  %1296 = vmatpush1.msra.mxu0 %v959
  %1297 = vmatprep.subr.mxu0 %v956
  %1298 = vmatpush1.msra.mxu0 %v955
  %1299 = vmatprep.subr.mxu0 %v952
  %1300 = vmatpush1.msra.mxu0 %v951
  %1301 = vmatprep.subr.mxu0 %v948
  %1302 = vmatpush1.msra.mxu0 %v947
  %1303 = vmatprep.subr.mxu0 0.0
  %1304 = vmatpush2.msra.mxu0 0.0
  %1305 = vmatprep.subr.mxu0 0.0
  %1306 = vmatpush2.msra.mxu0 0.0
  %1307 = vmatprep.subr.mxu0 0.0
  %1308 = vmatpush2.msra.mxu0 0.0
  %1309 = vmatprep.subr.mxu0 0.0
  %1310 = vmatpush2.msra.mxu0 0.0
  %1311 = vmatprep.subr.mxu0 0.0
  %1312 = vmatpush2.msra.mxu0 0.0
  %1313 = vmatprep.subr.mxu0 0.0
  %1314 = vmatpush2.msra.mxu0 0.0
  %1315 = vmatprep.subr.mxu0 0.0
  %1316 = vmatpush2.msra.mxu0 0.0
  %1317 = vmatprep.subr.mxu0 %v1076
  %1318 = vmatpush2.msra.mxu0 %v1073
  %1319 = vmatprep.subr.mxu0 %v1040
  %1320 = vmatpush2.msra.mxu0 %v1039
  %1321 = vmatprep.subr.mxu0 %v1036
  %1322 = vmatpush2.msra.mxu0 %v1035
  %1323 = vmatprep.subr.mxu0 %v1032
  %1324 = vmatpush2.msra.mxu0 %v1031
  %1325 = vmatprep.subr.mxu0 %v1028
  %1326 = vmatpush2.msra.mxu0 %v1027
  %1327 = vmatprep.subr.mxu0 %v1024
  %1328 = vmatpush2.msra.mxu0 %v1023
  %1329 = vmatprep.subr.mxu0 %v1020
  %1330 = vmatpush2.msra.mxu0 %v1019
  %1331 = vmatprep.subr.mxu0 %v1016
  %1332 = vmatpush2.msra.mxu0 %v1015
  %1333 = vmatprep.subr.mxu0 %v1012
  %1334 = vmatpush2.msra.mxu0 %v1011
  %1335 = vmatprep.mubr.f32.mxu0 %v1267
  %1336 = vmatmul.mubr.f32.gmra.mxu0 %v1257
  %v1337 = vpop.f32.mrf.mxu0
  %v1338 = vadd.f32 0.0, %v1337
  %v1339 = vpop.f32.mrf.mxu0
  %v1340 = vadd.f32 0.0, %v1339
  %1341 = vmatprep.mubr.f32.mxu0 %v1269
  %1342 = vmatmul.mubr.f32.gmra.mxu0 %v1262
  %v1343 = vpop.f32.mrf.mxu0
  %v1344 = vadd.f32 0.0, %v1343
  %v1345 = vpop.f32.mrf.mxu0
  %v1346 = vadd.f32 0.0, %v1345
  %1347 = vdwg.mxu0
  %1348 = vmatprep.subr.mxu0 %v1010
  %1349 = vmatpush1.msra.mxu0 %v1009
  %1350 = vmatprep.subr.mxu0 %v1006
  %1351 = vmatpush1.msra.mxu0 %v1005
  %1352 = vmatprep.subr.mxu0 %v1002
  %1353 = vmatpush1.msra.mxu0 %v1001
  %1354 = vmatprep.subr.mxu0 %v998
  %1355 = vmatpush1.msra.mxu0 %v997
  %1356 = vmatprep.subr.mxu0 %v994
  %1357 = vmatpush1.msra.mxu0 %v993
  %1358 = vmatprep.subr.mxu0 %v990
  %1359 = vmatpush1.msra.mxu0 %v989
  %1360 = vmatprep.subr.mxu0 %v986
  %1361 = vmatpush1.msra.mxu0 %v985
  %1362 = vmatprep.subr.mxu0 %v982
  %1363 = vmatpush1.msra.mxu0 %v981
  %1364 = vmatprep.subr.mxu0 %v978
  %1365 = vmatpush1.msra.mxu0 %v977
  %1366 = vmatprep.subr.mxu0 %v974
  %1367 = vmatpush1.msra.mxu0 %v973
  %1368 = vmatprep.subr.mxu0 %v970
  %1369 = vmatpush1.msra.mxu0 %v969
  %1370 = vmatprep.subr.mxu0 %v966
  %1371 = vmatpush1.msra.mxu0 %v965
  %1372 = vmatprep.subr.mxu0 %v962
  %1373 = vmatpush1.msra.mxu0 %v961
  %1374 = vmatprep.subr.mxu0 %v958
  %1375 = vmatpush1.msra.mxu0 %v957
  %1376 = vmatprep.subr.mxu0 %v954
  %1377 = vmatpush1.msra.mxu0 %v953
  %1378 = vmatprep.subr.mxu0 %v950
  %1379 = vmatpush1.msra.mxu0 %v949
  %1380 = vmatprep.subr.mxu0 0.0
  %1381 = vmatpush2.msra.mxu0 0.0
  %1382 = vmatprep.subr.mxu0 0.0
  %1383 = vmatpush2.msra.mxu0 0.0
  %1384 = vmatprep.subr.mxu0 0.0
  %1385 = vmatpush2.msra.mxu0 0.0
  %1386 = vmatprep.subr.mxu0 0.0
  %1387 = vmatpush2.msra.mxu0 0.0
  %1388 = vmatprep.subr.mxu0 0.0
  %1389 = vmatpush2.msra.mxu0 0.0
  %1390 = vmatprep.subr.mxu0 0.0
  %1391 = vmatpush2.msra.mxu0 0.0
  %1392 = vmatprep.subr.mxu0 0.0
  %1393 = vmatpush2.msra.mxu0 0.0
  %1394 = vmatprep.subr.mxu0 %v1082
  %1395 = vmatpush2.msra.mxu0 %v1079
  %1396 = vmatprep.subr.mxu0 %v1042
  %1397 = vmatpush2.msra.mxu0 %v1041
  %1398 = vmatprep.subr.mxu0 %v1038
  %1399 = vmatpush2.msra.mxu0 %v1037
  %1400 = vmatprep.subr.mxu0 %v1034
  %1401 = vmatpush2.msra.mxu0 %v1033
  %1402 = vmatprep.subr.mxu0 %v1030
  %1403 = vmatpush2.msra.mxu0 %v1029
  %1404 = vmatprep.subr.mxu0 %v1026
  %1405 = vmatpush2.msra.mxu0 %v1025
  %1406 = vmatprep.subr.mxu0 %v1022
  %1407 = vmatpush2.msra.mxu0 %v1021
  %1408 = vmatprep.subr.mxu0 %v1018
  %1409 = vmatpush2.msra.mxu0 %v1017
  %1410 = vmatprep.subr.mxu0 %v1014
  %1411 = vmatpush2.msra.mxu0 %v1013
  %1412 = vmatprep.mubr.f32.mxu0 %v1267
  %1413 = vmatmul.mubr.f32.gmra.mxu0 %v1257
  %v1414 = vpop.f32.mrf.mxu0
  %v1415 = vadd.f32 0.0, %v1414
  %v1416 = vpop.f32.mrf.mxu0
  %v1417 = vadd.f32 0.0, %v1416
  %1418 = vmatprep.mubr.f32.mxu0 %v1269
  %1419 = vmatmul.mubr.f32.gmra.mxu0 %v1262
  %v1420 = vpop.f32.mrf.mxu0
  %v1421 = vadd.f32 0.0, %v1420
  %v1422 = vpop.f32.mrf.mxu0
  %v1423 = vadd.f32 0.0, %v1422
  %1424 = vdwg.mxu0
  %v1425 = vadd.f32 %v859, %v1338
  %v1426 = vadd.f32 %v861, %v1340
  %v1427 = vadd.f32 %v936, %v1415
  %v1428 = vadd.f32 %v938, %v1417
  %v1429 = vadd.f32 %v865, %v1344
  %v1430 = vadd.f32 %v867, %v1346
  %v1431 = vadd.f32 %v942, %v1421
  %v1432 = vadd.f32 %v944, %v1423
  %s1433 = scalar_lea.vmem %s1, 2400
  %v1434 = vld [vmem:[%s1433] sm:$0xff]
  %v1435 = vld [vmem:[%s1433 + $0x8] sm:$0xff]
  %v1436 = vld [vmem:[%s1433 + $0x10] sm:$0xff]
  %v1437 = vld [vmem:[%s1433 + $0x18] sm:$0xff]
  %v1438 = vld [vmem:[%s1433 + $0x20] sm:$0xff]
  %v1439 = vld [vmem:[%s1433 + $0x28] sm:$0xff]
  %v1440 = vld [vmem:[%s1433 + $0x30] sm:$0xff]
  %v1441 = vld [vmem:[%s1433 + $0x38] sm:$0xff]
  %v1442 = vld [vmem:[%s1433 + $0x40] sm:$0xff]
  %v1443 = vld [vmem:[%s1433 + $0x48] sm:$0xff]
  %v1444 = vld [vmem:[%s1433 + $0x50] sm:$0xff]
  %v1445 = vld [vmem:[%s1433 + $0x58] sm:$0xff]
  %v1446 = vld [vmem:[%s1433 + $0x60] sm:$0xff]
  %v1447 = vld [vmem:[%s1433 + $0x68] sm:$0xff]
  %v1448 = vld [vmem:[%s1433 + $0x70] sm:$0xff]
  %v1449 = vld [vmem:[%s1433 + $0x78] sm:$0xff]
  %v1450 = vld [vmem:[%s1433 + $0x80] sm:$0xff]
  %v1451 = vld [vmem:[%s1433 + $0x88] sm:$0xff]
  %v1452 = vld [vmem:[%s1433 + $0x90] sm:$0xff]
  %v1453 = vld [vmem:[%s1433 + $0x98] sm:$0xff]
  %v1454 = vld [vmem:[%s1433 + $0xa0] sm:$0xff]
  %v1455 = vld [vmem:[%s1433 + $0xa8] sm:$0xff]
  %v1456 = vld [vmem:[%s1433 + $0xb0] sm:$0xff]
  %v1457 = vld [vmem:[%s1433 + $0xb8] sm:$0xff]
  %v1458 = vld [vmem:[%s1433 + $0xc0] sm:$0xff]
  %v1459 = vld [vmem:[%s1433 + $0xc8] sm:$0xff]
  %v1460 = vld [vmem:[%s1433 + $0xd0] sm:$0xff]
  %v1461 = vld [vmem:[%s1433 + $0xd8] sm:$0xff]
  %v1462 = vld [vmem:[%s1433 + $0xe0] sm:$0xff]
  %v1463 = vld [vmem:[%s1433 + $0xe8] sm:$0xff]
  %v1464 = vld [vmem:[%s1433 + $0xf0] sm:$0xff]
  %v1465 = vld [vmem:[%s1433 + $0xf8] sm:$0xff]
  %v1466 = vld [vmem:[%s1433 + $0x100] sm:$0xff]
  %v1467 = vld [vmem:[%s1433 + $0x108] sm:$0xff]
  %v1468 = vld [vmem:[%s1433 + $0x110] sm:$0xff]
  %v1469 = vld [vmem:[%s1433 + $0x118] sm:$0xff]
  %v1470 = vld [vmem:[%s1433 + $0x120] sm:$0xff]
  %v1471 = vld [vmem:[%s1433 + $0x128] sm:$0xff]
  %v1472 = vld [vmem:[%s1433 + $0x130] sm:$0xff]
  %v1473 = vld [vmem:[%s1433 + $0x138] sm:$0xff]
  %v1474 = vld [vmem:[%s1433 + $0x140] sm:$0xff]
  %v1475 = vld [vmem:[%s1433 + $0x148] sm:$0xff]
  %v1476 = vld [vmem:[%s1433 + $0x150] sm:$0xff]
  %v1477 = vld [vmem:[%s1433 + $0x158] sm:$0xff]
  %v1478 = vld [vmem:[%s1433 + $0x160] sm:$0xff]
  %v1479 = vld [vmem:[%s1433 + $0x168] sm:$0xff]
  %v1480 = vld [vmem:[%s1433 + $0x170] sm:$0xff]
  %v1481 = vld [vmem:[%s1433 + $0x178] sm:$0xff]
  %v1482 = vld [vmem:[%s1433 + $0x180] sm:$0xff]
  %v1483 = vld [vmem:[%s1433 + $0x188] sm:$0xff]
  %v1484 = vld [vmem:[%s1433 + $0x190] sm:$0xff]
  %v1485 = vld [vmem:[%s1433 + $0x198] sm:$0xff]
  %v1486 = vld [vmem:[%s1433 + $0x1a0] sm:$0xff]
  %v1487 = vld [vmem:[%s1433 + $0x1a8] sm:$0xff]
  %v1488 = vld [vmem:[%s1433 + $0x1b0] sm:$0xff]
  %v1489 = vld [vmem:[%s1433 + $0x1b8] sm:$0xff]
  %v1490 = vld [vmem:[%s1433 + $0x1c0] sm:$0xff]
  %v1491 = vld [vmem:[%s1433 + $0x1c8] sm:$0xff]
  %v1492 = vld [vmem:[%s1433 + $0x1d0] sm:$0xff]
  %v1493 = vld [vmem:[%s1433 + $0x1d8] sm:$0xff]
  %v1494 = vld [vmem:[%s1433 + $0x1e0] sm:$0xff]
  %v1495 = vld [vmem:[%s1433 + $0x1e8] sm:$0xff]
  %v1496 = vld [vmem:[%s1433 + $0x1f0] sm:$0xff]
  %v1497 = vld [vmem:[%s1433 + $0x1f8] sm:$0xff]
  %v1498 = vld [vmem:[%s1433 + $0x200] sm:$0xff]
  %v1499 = vld [vmem:[%s1433 + $0x208] sm:$0xff]
  %v1500 = vld [vmem:[%s1433 + $0x210] sm:$0xff]
  %v1501 = vld [vmem:[%s1433 + $0x218] sm:$0xff]
  %v1502 = vld [vmem:[%s1433 + $0x220] sm:$0xff]
  %v1503 = vld [vmem:[%s1433 + $0x228] sm:$0xff]
  %v1504 = vld [vmem:[%s1433 + $0x230] sm:$0xff]
  %v1505 = vld [vmem:[%s1433 + $0x238] sm:$0xff]
  %v1506 = vld [vmem:[%s1433 + $0x240] sm:$0xff]
  %v1507 = vld [vmem:[%s1433 + $0x248] sm:$0xff]
  %v1508 = vld [vmem:[%s1433 + $0x250] sm:$0xff]
  %v1509 = vld [vmem:[%s1433 + $0x258] sm:$0xff]
  %v1510 = vld [vmem:[%s1433 + $0x260] sm:$0xff]
  %v1511 = vld [vmem:[%s1433 + $0x268] sm:$0xff]
  %v1512 = vld [vmem:[%s1433 + $0x270] sm:$0xff]
  %v1513 = vld [vmem:[%s1433 + $0x278] sm:$0xff]
  %v1514 = vld [vmem:[%s1433 + $0x280] sm:$0xff]
  %v1515 = vld [vmem:[%s1433 + $0x288] sm:$0xff]
  %v1516 = vld [vmem:[%s1433 + $0x290] sm:$0xff]
  %v1517 = vld [vmem:[%s1433 + $0x298] sm:$0xff]
  %v1518 = vld [vmem:[%s1433 + $0x2a0] sm:$0xff]
  %v1519 = vld [vmem:[%s1433 + $0x2a8] sm:$0xff]
  %v1520 = vld [vmem:[%s1433 + $0x2b0] sm:$0xff]
  %v1521 = vld [vmem:[%s1433 + $0x2b8] sm:$0xff]
  %v1522 = vld [vmem:[%s1433 + $0x2c0] sm:$0xff]
  %v1523 = vld [vmem:[%s1433 + $0x2c8] sm:$0xff]
  %v1524 = vld [vmem:[%s1433 + $0x2d0] sm:$0xff]
  %v1525 = vld [vmem:[%s1433 + $0x2d8] sm:$0xff]
  %v1526 = vld [vmem:[%s1433 + $0x2e0] sm:$0xff]
  %v1527 = vld [vmem:[%s1433 + $0x2e8] sm:$0xff]
  %v1528 = vld [vmem:[%s1433 + $0x2f0] sm:$0xff]
  %v1529 = vld [vmem:[%s1433 + $0x2f8] sm:$0xff]
  %v1530 = vld [vmem:[%s1433 + $0x300] sm:$0xf]
  %v1531 = vld [vmem:[%s1433 + $0x308] sm:$0xf]
  %v1532 = vld [vmem:[%s1433 + $0x310] sm:$0xf]
  %v1533 = vld [vmem:[%s1433 + $0x318] sm:$0xf]
  %v1534 = vld [vmem:[%s0] sm:$0xf8]
  %v1535 = vld [vmem:[%s0 + $0x8] sm:$0xf8]
  %v1536 = vld [vmem:[%s0 + $0x20] sm:$0x7]
  %v1537 = vld [vmem:[%s0 + $0x28] sm:$0x7]
  %vm1542 = vcmask 1044480
  %v1543 = vrot.slane %v1534, 3
  %v1544 = vrot.slane %v116, 3
  %v1545 = vsel %vm1542, %v1543, %v1544
  %v1546 = vrot.slane %v1535, 3
  %v1547 = vrot.slane %v117, 3
  %v1548 = vsel %vm1542, %v1546, %v1547
  %v1549 = vrot.slane %v1536, 3
  %v1550 = vsel %vm1542, %v1544, %v1549
  %v1551 = vrot.slane %v1537, 3
  %v1552 = vsel %vm1542, %v1547, %v1551
  %v1555 = vsel %vm248, %v1548, 0
  %v1557 = vsel %vm248, %v1552, 0
  %v1560 = vsel %vm253, %v1530, 0
  %v1563 = vsel %vm253, %v1531, 0
  %v1566 = vsel %vm253, %v1532, 0
  %v1569 = vsel %vm253, %v1533, 0
  %1571 = vmatprep.subr.mxu0 %v1495
  %1572 = vmatpush1.msra.mxu0 %v1494
  %1573 = vmatprep.subr.mxu0 %v1491
  %1574 = vmatpush1.msra.mxu0 %v1490
  %1575 = vmatprep.subr.mxu0 %v1487
  %1576 = vmatpush1.msra.mxu0 %v1486
  %1577 = vmatprep.subr.mxu0 %v1483
  %1578 = vmatpush1.msra.mxu0 %v1482
  %1579 = vmatprep.subr.mxu0 %v1479
  %1580 = vmatpush1.msra.mxu0 %v1478
  %1581 = vmatprep.subr.mxu0 %v1475
  %1582 = vmatpush1.msra.mxu0 %v1474
  %1583 = vmatprep.subr.mxu0 %v1471
  %1584 = vmatpush1.msra.mxu0 %v1470
  %1585 = vmatprep.subr.mxu0 %v1467
  %1586 = vmatpush1.msra.mxu0 %v1466
  %1587 = vmatprep.subr.mxu0 %v1463
  %1588 = vmatpush1.msra.mxu0 %v1462
  %1589 = vmatprep.subr.mxu0 %v1459
  %1590 = vmatpush1.msra.mxu0 %v1458
  %1591 = vmatprep.subr.mxu0 %v1455
  %1592 = vmatpush1.msra.mxu0 %v1454
  %1593 = vmatprep.subr.mxu0 %v1451
  %1594 = vmatpush1.msra.mxu0 %v1450
  %1595 = vmatprep.subr.mxu0 %v1447
  %1596 = vmatpush1.msra.mxu0 %v1446
  %1597 = vmatprep.subr.mxu0 %v1443
  %1598 = vmatpush1.msra.mxu0 %v1442
  %1599 = vmatprep.subr.mxu0 %v1439
  %1600 = vmatpush1.msra.mxu0 %v1438
  %1601 = vmatprep.subr.mxu0 %v1435
  %1602 = vmatpush1.msra.mxu0 %v1434
  %1603 = vmatprep.subr.mxu0 0.0
  %1604 = vmatpush2.msra.mxu0 0.0
  %1605 = vmatprep.subr.mxu0 0.0
  %1606 = vmatpush2.msra.mxu0 0.0
  %1607 = vmatprep.subr.mxu0 0.0
  %1608 = vmatpush2.msra.mxu0 0.0
  %1609 = vmatprep.subr.mxu0 0.0
  %1610 = vmatpush2.msra.mxu0 0.0
  %1611 = vmatprep.subr.mxu0 0.0
  %1612 = vmatpush2.msra.mxu0 0.0
  %1613 = vmatprep.subr.mxu0 0.0
  %1614 = vmatpush2.msra.mxu0 0.0
  %1615 = vmatprep.subr.mxu0 0.0
  %1616 = vmatpush2.msra.mxu0 0.0
  %1617 = vmatprep.subr.mxu0 %v1563
  %1618 = vmatpush2.msra.mxu0 %v1560
  %1619 = vmatprep.subr.mxu0 %v1527
  %1620 = vmatpush2.msra.mxu0 %v1526
  %1621 = vmatprep.subr.mxu0 %v1523
  %1622 = vmatpush2.msra.mxu0 %v1522
  %1623 = vmatprep.subr.mxu0 %v1519
  %1624 = vmatpush2.msra.mxu0 %v1518
  %1625 = vmatprep.subr.mxu0 %v1515
  %1626 = vmatpush2.msra.mxu0 %v1514
  %1627 = vmatprep.subr.mxu0 %v1511
  %1628 = vmatpush2.msra.mxu0 %v1510
  %1629 = vmatprep.subr.mxu0 %v1507
  %1630 = vmatpush2.msra.mxu0 %v1506
  %1631 = vmatprep.subr.mxu0 %v1503
  %1632 = vmatpush2.msra.mxu0 %v1502
  %1633 = vmatprep.subr.mxu0 %v1499
  %1634 = vmatpush2.msra.mxu0 %v1498
  %1635 = vmatprep.mubr.f32.mxu0 %v1555
  %1636 = vmatmul.mubr.f32.gmra.mxu0 %v1545
  %v1637 = vpop.f32.mrf.mxu0
  %v1638 = vadd.f32 0.0, %v1637
  %v1639 = vpop.f32.mrf.mxu0
  %v1640 = vadd.f32 0.0, %v1639
  %1641 = vmatprep.mubr.f32.mxu0 %v1557
  %1642 = vmatmul.mubr.f32.gmra.mxu0 %v1550
  %v1643 = vpop.f32.mrf.mxu0
  %v1644 = vadd.f32 0.0, %v1643
  %v1645 = vpop.f32.mrf.mxu0
  %v1646 = vadd.f32 0.0, %v1645
  %1647 = vdwg.mxu0
  %1648 = vmatprep.subr.mxu0 %v1497
  %1649 = vmatpush1.msra.mxu0 %v1496
  %1650 = vmatprep.subr.mxu0 %v1493
  %1651 = vmatpush1.msra.mxu0 %v1492
  %1652 = vmatprep.subr.mxu0 %v1489
  %1653 = vmatpush1.msra.mxu0 %v1488
  %1654 = vmatprep.subr.mxu0 %v1485
  %1655 = vmatpush1.msra.mxu0 %v1484
  %1656 = vmatprep.subr.mxu0 %v1481
  %1657 = vmatpush1.msra.mxu0 %v1480
  %1658 = vmatprep.subr.mxu0 %v1477
  %1659 = vmatpush1.msra.mxu0 %v1476
  %1660 = vmatprep.subr.mxu0 %v1473
  %1661 = vmatpush1.msra.mxu0 %v1472
  %1662 = vmatprep.subr.mxu0 %v1469
  %1663 = vmatpush1.msra.mxu0 %v1468
  %1664 = vmatprep.subr.mxu0 %v1465
  %1665 = vmatpush1.msra.mxu0 %v1464
  %1666 = vmatprep.subr.mxu0 %v1461
  %1667 = vmatpush1.msra.mxu0 %v1460
  %1668 = vmatprep.subr.mxu0 %v1457
  %1669 = vmatpush1.msra.mxu0 %v1456
  %1670 = vmatprep.subr.mxu0 %v1453
  %1671 = vmatpush1.msra.mxu0 %v1452
  %1672 = vmatprep.subr.mxu0 %v1449
  %1673 = vmatpush1.msra.mxu0 %v1448
  %1674 = vmatprep.subr.mxu0 %v1445
  %1675 = vmatpush1.msra.mxu0 %v1444
  %1676 = vmatprep.subr.mxu0 %v1441
  %1677 = vmatpush1.msra.mxu0 %v1440
  %1678 = vmatprep.subr.mxu0 %v1437
  %1679 = vmatpush1.msra.mxu0 %v1436
  %1680 = vmatprep.subr.mxu0 0.0
  %1681 = vmatpush2.msra.mxu0 0.0
  %1682 = vmatprep.subr.mxu0 0.0
  %1683 = vmatpush2.msra.mxu0 0.0
  %1684 = vmatprep.subr.mxu0 0.0
  %1685 = vmatpush2.msra.mxu0 0.0
  %1686 = vmatprep.subr.mxu0 0.0
  %1687 = vmatpush2.msra.mxu0 0.0
  %1688 = vmatprep.subr.mxu0 0.0
  %1689 = vmatpush2.msra.mxu0 0.0
  %1690 = vmatprep.subr.mxu0 0.0
  %1691 = vmatpush2.msra.mxu0 0.0
  %1692 = vmatprep.subr.mxu0 0.0
  %1693 = vmatpush2.msra.mxu0 0.0
  %1694 = vmatprep.subr.mxu0 %v1569
  %1695 = vmatpush2.msra.mxu0 %v1566
  %1696 = vmatprep.subr.mxu0 %v1529
  %1697 = vmatpush2.msra.mxu0 %v1528
  %1698 = vmatprep.subr.mxu0 %v1525
  %1699 = vmatpush2.msra.mxu0 %v1524
  %1700 = vmatprep.subr.mxu0 %v1521
  %1701 = vmatpush2.msra.mxu0 %v1520
  %1702 = vmatprep.subr.mxu0 %v1517
  %1703 = vmatpush2.msra.mxu0 %v1516
  %1704 = vmatprep.subr.mxu0 %v1513
  %1705 = vmatpush2.msra.mxu0 %v1512
  %1706 = vmatprep.subr.mxu0 %v1509
  %1707 = vmatpush2.msra.mxu0 %v1508
  %1708 = vmatprep.subr.mxu0 %v1505
  %1709 = vmatpush2.msra.mxu0 %v1504
  %1710 = vmatprep.subr.mxu0 %v1501
  %1711 = vmatpush2.msra.mxu0 %v1500
  %1712 = vmatprep.mubr.f32.mxu0 %v1555
  %1713 = vmatmul.mubr.f32.gmra.mxu0 %v1545
  %v1714 = vpop.f32.mrf.mxu0
  %v1715 = vadd.f32 0.0, %v1714
  %v1716 = vpop.f32.mrf.mxu0
  %v1717 = vadd.f32 0.0, %v1716
  %1718 = vmatprep.mubr.f32.mxu0 %v1557
  %1719 = vmatmul.mubr.f32.gmra.mxu0 %v1550
  %v1720 = vpop.f32.mrf.mxu0
  %v1721 = vadd.f32 0.0, %v1720
  %v1722 = vpop.f32.mrf.mxu0
  %v1723 = vadd.f32 0.0, %v1722
  %1724 = vdwg.mxu0
  %v1725 = vadd.f32 %v1238, %v1638
  %v1726 = vadd.f32 %v1239, %v1640
  %v1727 = vadd.f32 %v1240, %v1715
  %v1728 = vadd.f32 %v1241, %v1717
  %v1729 = vadd.f32 %v1242, %v1644
  %v1730 = vadd.f32 %v1243, %v1646
  %v1731 = vadd.f32 %v1244, %v1721
  %v1732 = vadd.f32 %v1245, %v1723
  %v1733 = vld [vmem:[%s0 + $0x20] sm:$0x80]
  %v1734 = vld [vmem:[%s0 + $0x28] sm:$0x80]
  %v1735 = vld [vmem:[%s0 + $0x40] sm:$0x7f]
  %v1736 = vld [vmem:[%s0 + $0x48] sm:$0x7f]
  %vm1741 = vcmask 1040384
  %v1742 = vrot.slane %v1733, 7
  %v1743 = vrot.slane %v120, 7
  %v1744 = vsel %vm1741, %v1742, %v1743
  %v1745 = vrot.slane %v1734, 7
  %v1746 = vrot.slane %v121, 7
  %v1747 = vsel %vm1741, %v1745, %v1746
  %v1748 = vrot.slane %v1735, 7
  %v1749 = vsel %vm1741, %v1743, %v1748
  %v1750 = vrot.slane %v1736, 7
  %v1751 = vsel %vm1741, %v1746, %v1750
  %v1754 = vsel %vm248, %v1747, 0
  %v1756 = vsel %vm248, %v1751, 0
  %1758 = vmatprep.subr.mxu0 %v1495
  %1759 = vmatpush1.msra.mxu0 %v1494
  %1760 = vmatprep.subr.mxu0 %v1491
  %1761 = vmatpush1.msra.mxu0 %v1490
  %1762 = vmatprep.subr.mxu0 %v1487
  %1763 = vmatpush1.msra.mxu0 %v1486
  %1764 = vmatprep.subr.mxu0 %v1483
  %1765 = vmatpush1.msra.mxu0 %v1482
  %1766 = vmatprep.subr.mxu0 %v1479
  %1767 = vmatpush1.msra.mxu0 %v1478
  %1768 = vmatprep.subr.mxu0 %v1475
  %1769 = vmatpush1.msra.mxu0 %v1474
  %1770 = vmatprep.subr.mxu0 %v1471
  %1771 = vmatpush1.msra.mxu0 %v1470
  %1772 = vmatprep.subr.mxu0 %v1467
  %1773 = vmatpush1.msra.mxu0 %v1466
  %1774 = vmatprep.subr.mxu0 %v1463
  %1775 = vmatpush1.msra.mxu0 %v1462
  %1776 = vmatprep.subr.mxu0 %v1459
  %1777 = vmatpush1.msra.mxu0 %v1458
  %1778 = vmatprep.subr.mxu0 %v1455
  %1779 = vmatpush1.msra.mxu0 %v1454
  %1780 = vmatprep.subr.mxu0 %v1451
  %1781 = vmatpush1.msra.mxu0 %v1450
  %1782 = vmatprep.subr.mxu0 %v1447
  %1783 = vmatpush1.msra.mxu0 %v1446
  %1784 = vmatprep.subr.mxu0 %v1443
  %1785 = vmatpush1.msra.mxu0 %v1442
  %1786 = vmatprep.subr.mxu0 %v1439
  %1787 = vmatpush1.msra.mxu0 %v1438
  %1788 = vmatprep.subr.mxu0 %v1435
  %1789 = vmatpush1.msra.mxu0 %v1434
  %1790 = vmatprep.subr.mxu0 0.0
  %1791 = vmatpush2.msra.mxu0 0.0
  %1792 = vmatprep.subr.mxu0 0.0
  %1793 = vmatpush2.msra.mxu0 0.0
  %1794 = vmatprep.subr.mxu0 0.0
  %1795 = vmatpush2.msra.mxu0 0.0
  %1796 = vmatprep.subr.mxu0 0.0
  %1797 = vmatpush2.msra.mxu0 0.0
  %1798 = vmatprep.subr.mxu0 0.0
  %1799 = vmatpush2.msra.mxu0 0.0
  %1800 = vmatprep.subr.mxu0 0.0
  %1801 = vmatpush2.msra.mxu0 0.0
  %1802 = vmatprep.subr.mxu0 0.0
  %1803 = vmatpush2.msra.mxu0 0.0
  %1804 = vmatprep.subr.mxu0 %v1563
  %1805 = vmatpush2.msra.mxu0 %v1560
  %1806 = vmatprep.subr.mxu0 %v1527
  %1807 = vmatpush2.msra.mxu0 %v1526
  %1808 = vmatprep.subr.mxu0 %v1523
  %1809 = vmatpush2.msra.mxu0 %v1522
  %1810 = vmatprep.subr.mxu0 %v1519
  %1811 = vmatpush2.msra.mxu0 %v1518
  %1812 = vmatprep.subr.mxu0 %v1515
  %1813 = vmatpush2.msra.mxu0 %v1514
  %1814 = vmatprep.subr.mxu0 %v1511
  %1815 = vmatpush2.msra.mxu0 %v1510
  %1816 = vmatprep.subr.mxu0 %v1507
  %1817 = vmatpush2.msra.mxu0 %v1506
  %1818 = vmatprep.subr.mxu0 %v1503
  %1819 = vmatpush2.msra.mxu0 %v1502
  %1820 = vmatprep.subr.mxu0 %v1499
  %1821 = vmatpush2.msra.mxu0 %v1498
  %1822 = vmatprep.mubr.f32.mxu0 %v1754
  %1823 = vmatmul.mubr.f32.gmra.mxu0 %v1744
  %v1824 = vpop.f32.mrf.mxu0
  %v1825 = vadd.f32 0.0, %v1824
  %v1826 = vpop.f32.mrf.mxu0
  %v1827 = vadd.f32 0.0, %v1826
  %1828 = vmatprep.mubr.f32.mxu0 %v1756
  %1829 = vmatmul.mubr.f32.gmra.mxu0 %v1749
  %v1830 = vpop.f32.mrf.mxu0
  %v1831 = vadd.f32 0.0, %v1830
  %v1832 = vpop.f32.mrf.mxu0
  %v1833 = vadd.f32 0.0, %v1832
  %1834 = vdwg.mxu0
  %1835 = vmatprep.subr.mxu0 %v1497
  %1836 = vmatpush1.msra.mxu0 %v1496
  %1837 = vmatprep.subr.mxu0 %v1493
  %1838 = vmatpush1.msra.mxu0 %v1492
  %1839 = vmatprep.subr.mxu0 %v1489
  %1840 = vmatpush1.msra.mxu0 %v1488
  %1841 = vmatprep.subr.mxu0 %v1485
  %1842 = vmatpush1.msra.mxu0 %v1484
  %1843 = vmatprep.subr.mxu0 %v1481
  %1844 = vmatpush1.msra.mxu0 %v1480
  %1845 = vmatprep.subr.mxu0 %v1477
  %1846 = vmatpush1.msra.mxu0 %v1476
  %1847 = vmatprep.subr.mxu0 %v1473
  %1848 = vmatpush1.msra.mxu0 %v1472
  %1849 = vmatprep.subr.mxu0 %v1469
  %1850 = vmatpush1.msra.mxu0 %v1468
  %1851 = vmatprep.subr.mxu0 %v1465
  %1852 = vmatpush1.msra.mxu0 %v1464
  %1853 = vmatprep.subr.mxu0 %v1461
  %1854 = vmatpush1.msra.mxu0 %v1460
  %1855 = vmatprep.subr.mxu0 %v1457
  %1856 = vmatpush1.msra.mxu0 %v1456
  %1857 = vmatprep.subr.mxu0 %v1453
  %1858 = vmatpush1.msra.mxu0 %v1452
  %1859 = vmatprep.subr.mxu0 %v1449
  %1860 = vmatpush1.msra.mxu0 %v1448
  %1861 = vmatprep.subr.mxu0 %v1445
  %1862 = vmatpush1.msra.mxu0 %v1444
  %1863 = vmatprep.subr.mxu0 %v1441
  %1864 = vmatpush1.msra.mxu0 %v1440
  %1865 = vmatprep.subr.mxu0 %v1437
  %1866 = vmatpush1.msra.mxu0 %v1436
  %1867 = vmatprep.subr.mxu0 0.0
  %1868 = vmatpush2.msra.mxu0 0.0
  %1869 = vmatprep.subr.mxu0 0.0
  %1870 = vmatpush2.msra.mxu0 0.0
  %1871 = vmatprep.subr.mxu0 0.0
  %1872 = vmatpush2.msra.mxu0 0.0
  %1873 = vmatprep.subr.mxu0 0.0
  %1874 = vmatpush2.msra.mxu0 0.0
  %1875 = vmatprep.subr.mxu0 0.0
  %1876 = vmatpush2.msra.mxu0 0.0
  %1877 = vmatprep.subr.mxu0 0.0
  %1878 = vmatpush2.msra.mxu0 0.0
  %1879 = vmatprep.subr.mxu0 0.0
  %1880 = vmatpush2.msra.mxu0 0.0
  %1881 = vmatprep.subr.mxu0 %v1569
  %1882 = vmatpush2.msra.mxu0 %v1566
  %1883 = vmatprep.subr.mxu0 %v1529
  %1884 = vmatpush2.msra.mxu0 %v1528
  %1885 = vmatprep.subr.mxu0 %v1525
  %1886 = vmatpush2.msra.mxu0 %v1524
  %1887 = vmatprep.subr.mxu0 %v1521
  %1888 = vmatpush2.msra.mxu0 %v1520
  %1889 = vmatprep.subr.mxu0 %v1517
  %1890 = vmatpush2.msra.mxu0 %v1516
  %1891 = vmatprep.subr.mxu0 %v1513
  %1892 = vmatpush2.msra.mxu0 %v1512
  %1893 = vmatprep.subr.mxu0 %v1509
  %1894 = vmatpush2.msra.mxu0 %v1508
  %1895 = vmatprep.subr.mxu0 %v1505
  %1896 = vmatpush2.msra.mxu0 %v1504
  %1897 = vmatprep.subr.mxu0 %v1501
  %1898 = vmatpush2.msra.mxu0 %v1500
  %1899 = vmatprep.mubr.f32.mxu0 %v1754
  %1900 = vmatmul.mubr.f32.gmra.mxu0 %v1744
  %v1901 = vpop.f32.mrf.mxu0
  %v1902 = vadd.f32 0.0, %v1901
  %v1903 = vpop.f32.mrf.mxu0
  %v1904 = vadd.f32 0.0, %v1903
  %1905 = vmatprep.mubr.f32.mxu0 %v1756
  %1906 = vmatmul.mubr.f32.gmra.mxu0 %v1749
  %v1907 = vpop.f32.mrf.mxu0
  %v1908 = vadd.f32 0.0, %v1907
  %v1909 = vpop.f32.mrf.mxu0
  %v1910 = vadd.f32 0.0, %v1909
  %1911 = vdwg.mxu0
  %v1912 = vadd.f32 %v1425, %v1825
  %v1913 = vadd.f32 %v1426, %v1827
  %v1914 = vadd.f32 %v1427, %v1902
  %v1915 = vadd.f32 %v1428, %v1904
  %v1916 = vadd.f32 %v1429, %v1831
  %v1917 = vadd.f32 %v1430, %v1833
  %v1918 = vadd.f32 %v1431, %v1908
  %v1919 = vadd.f32 %v1432, %v1910
  %s1920 = scalar_lea.vmem %s1, 3200
  %v1921 = vld [vmem:[%s1920] sm:$0xff]
  %v1922 = vld [vmem:[%s1920 + $0x8] sm:$0xff]
  %v1923 = vld [vmem:[%s1920 + $0x10] sm:$0xff]
  %v1924 = vld [vmem:[%s1920 + $0x18] sm:$0xff]
  %v1925 = vld [vmem:[%s1920 + $0x20] sm:$0xff]
  %v1926 = vld [vmem:[%s1920 + $0x28] sm:$0xff]
  %v1927 = vld [vmem:[%s1920 + $0x30] sm:$0xff]
  %v1928 = vld [vmem:[%s1920 + $0x38] sm:$0xff]
  %v1929 = vld [vmem:[%s1920 + $0x40] sm:$0xff]
  %v1930 = vld [vmem:[%s1920 + $0x48] sm:$0xff]
  %v1931 = vld [vmem:[%s1920 + $0x50] sm:$0xff]
  %v1932 = vld [vmem:[%s1920 + $0x58] sm:$0xff]
  %v1933 = vld [vmem:[%s1920 + $0x60] sm:$0xff]
  %v1934 = vld [vmem:[%s1920 + $0x68] sm:$0xff]
  %v1935 = vld [vmem:[%s1920 + $0x70] sm:$0xff]
  %v1936 = vld [vmem:[%s1920 + $0x78] sm:$0xff]
  %v1937 = vld [vmem:[%s1920 + $0x80] sm:$0xff]
  %v1938 = vld [vmem:[%s1920 + $0x88] sm:$0xff]
  %v1939 = vld [vmem:[%s1920 + $0x90] sm:$0xff]
  %v1940 = vld [vmem:[%s1920 + $0x98] sm:$0xff]
  %v1941 = vld [vmem:[%s1920 + $0xa0] sm:$0xff]
  %v1942 = vld [vmem:[%s1920 + $0xa8] sm:$0xff]
  %v1943 = vld [vmem:[%s1920 + $0xb0] sm:$0xff]
  %v1944 = vld [vmem:[%s1920 + $0xb8] sm:$0xff]
  %v1945 = vld [vmem:[%s1920 + $0xc0] sm:$0xff]
  %v1946 = vld [vmem:[%s1920 + $0xc8] sm:$0xff]
  %v1947 = vld [vmem:[%s1920 + $0xd0] sm:$0xff]
  %v1948 = vld [vmem:[%s1920 + $0xd8] sm:$0xff]
  %v1949 = vld [vmem:[%s1920 + $0xe0] sm:$0xff]
  %v1950 = vld [vmem:[%s1920 + $0xe8] sm:$0xff]
  %v1951 = vld [vmem:[%s1920 + $0xf0] sm:$0xff]
  %v1952 = vld [vmem:[%s1920 + $0xf8] sm:$0xff]
  %v1953 = vld [vmem:[%s1920 + $0x100] sm:$0xff]
  %v1954 = vld [vmem:[%s1920 + $0x108] sm:$0xff]
  %v1955 = vld [vmem:[%s1920 + $0x110] sm:$0xff]
  %v1956 = vld [vmem:[%s1920 + $0x118] sm:$0xff]
  %v1957 = vld [vmem:[%s1920 + $0x120] sm:$0xff]
  %v1958 = vld [vmem:[%s1920 + $0x128] sm:$0xff]
  %v1959 = vld [vmem:[%s1920 + $0x130] sm:$0xff]
  %v1960 = vld [vmem:[%s1920 + $0x138] sm:$0xff]
  %v1961 = vld [vmem:[%s1920 + $0x140] sm:$0xff]
  %v1962 = vld [vmem:[%s1920 + $0x148] sm:$0xff]
  %v1963 = vld [vmem:[%s1920 + $0x150] sm:$0xff]
  %v1964 = vld [vmem:[%s1920 + $0x158] sm:$0xff]
  %v1965 = vld [vmem:[%s1920 + $0x160] sm:$0xff]
  %v1966 = vld [vmem:[%s1920 + $0x168] sm:$0xff]
  %v1967 = vld [vmem:[%s1920 + $0x170] sm:$0xff]
  %v1968 = vld [vmem:[%s1920 + $0x178] sm:$0xff]
  %v1969 = vld [vmem:[%s1920 + $0x180] sm:$0xff]
  %v1970 = vld [vmem:[%s1920 + $0x188] sm:$0xff]
  %v1971 = vld [vmem:[%s1920 + $0x190] sm:$0xff]
  %v1972 = vld [vmem:[%s1920 + $0x198] sm:$0xff]
  %v1973 = vld [vmem:[%s1920 + $0x1a0] sm:$0xff]
  %v1974 = vld [vmem:[%s1920 + $0x1a8] sm:$0xff]
  %v1975 = vld [vmem:[%s1920 + $0x1b0] sm:$0xff]
  %v1976 = vld [vmem:[%s1920 + $0x1b8] sm:$0xff]
  %v1977 = vld [vmem:[%s1920 + $0x1c0] sm:$0xff]
  %v1978 = vld [vmem:[%s1920 + $0x1c8] sm:$0xff]
  %v1979 = vld [vmem:[%s1920 + $0x1d0] sm:$0xff]
  %v1980 = vld [vmem:[%s1920 + $0x1d8] sm:$0xff]
  %v1981 = vld [vmem:[%s1920 + $0x1e0] sm:$0xff]
  %v1982 = vld [vmem:[%s1920 + $0x1e8] sm:$0xff]
  %v1983 = vld [vmem:[%s1920 + $0x1f0] sm:$0xff]
  %v1984 = vld [vmem:[%s1920 + $0x1f8] sm:$0xff]
  %v1985 = vld [vmem:[%s1920 + $0x200] sm:$0xff]
  %v1986 = vld [vmem:[%s1920 + $0x208] sm:$0xff]
  %v1987 = vld [vmem:[%s1920 + $0x210] sm:$0xff]
  %v1988 = vld [vmem:[%s1920 + $0x218] sm:$0xff]
  %v1989 = vld [vmem:[%s1920 + $0x220] sm:$0xff]
  %v1990 = vld [vmem:[%s1920 + $0x228] sm:$0xff]
  %v1991 = vld [vmem:[%s1920 + $0x230] sm:$0xff]
  %v1992 = vld [vmem:[%s1920 + $0x238] sm:$0xff]
  %v1993 = vld [vmem:[%s1920 + $0x240] sm:$0xff]
  %v1994 = vld [vmem:[%s1920 + $0x248] sm:$0xff]
  %v1995 = vld [vmem:[%s1920 + $0x250] sm:$0xff]
  %v1996 = vld [vmem:[%s1920 + $0x258] sm:$0xff]
  %v1997 = vld [vmem:[%s1920 + $0x260] sm:$0xff]
  %v1998 = vld [vmem:[%s1920 + $0x268] sm:$0xff]
  %v1999 = vld [vmem:[%s1920 + $0x270] sm:$0xff]
  %v2000 = vld [vmem:[%s1920 + $0x278] sm:$0xff]
  %v2001 = vld [vmem:[%s1920 + $0x280] sm:$0xff]
  %v2002 = vld [vmem:[%s1920 + $0x288] sm:$0xff]
  %v2003 = vld [vmem:[%s1920 + $0x290] sm:$0xff]
  %v2004 = vld [vmem:[%s1920 + $0x298] sm:$0xff]
  %v2005 = vld [vmem:[%s1920 + $0x2a0] sm:$0xff]
  %v2006 = vld [vmem:[%s1920 + $0x2a8] sm:$0xff]
  %v2007 = vld [vmem:[%s1920 + $0x2b0] sm:$0xff]
  %v2008 = vld [vmem:[%s1920 + $0x2b8] sm:$0xff]
  %v2009 = vld [vmem:[%s1920 + $0x2c0] sm:$0xff]
  %v2010 = vld [vmem:[%s1920 + $0x2c8] sm:$0xff]
  %v2011 = vld [vmem:[%s1920 + $0x2d0] sm:$0xff]
  %v2012 = vld [vmem:[%s1920 + $0x2d8] sm:$0xff]
  %v2013 = vld [vmem:[%s1920 + $0x2e0] sm:$0xff]
  %v2014 = vld [vmem:[%s1920 + $0x2e8] sm:$0xff]
  %v2015 = vld [vmem:[%s1920 + $0x2f0] sm:$0xff]
  %v2016 = vld [vmem:[%s1920 + $0x2f8] sm:$0xff]
  %v2017 = vld [vmem:[%s1920 + $0x300] sm:$0xf]
  %v2018 = vld [vmem:[%s1920 + $0x308] sm:$0xf]
  %v2019 = vld [vmem:[%s1920 + $0x310] sm:$0xf]
  %v2020 = vld [vmem:[%s1920 + $0x318] sm:$0xf]
  %v2021 = vld [vmem:[%s0] sm:$0xf0]
  %v2022 = vld [vmem:[%s0 + $0x8] sm:$0xf0]
  %v2023 = vld [vmem:[%s0 + $0x20] sm:$0xf]
  %v2024 = vld [vmem:[%s0 + $0x28] sm:$0xf]
  %v2029 = vrot.slane %v2021, 4
  %v2030 = vrot.slane %v116, 4
  %v2031 = vsel %vm253, %v2029, %v2030
  %v2032 = vrot.slane %v2022, 4
  %v2033 = vrot.slane %v117, 4
  %v2034 = vsel %vm253, %v2032, %v2033
  %v2035 = vrot.slane %v2023, 4
  %v2036 = vsel %vm253, %v2030, %v2035
  %v2037 = vrot.slane %v2024, 4
  %v2038 = vsel %vm253, %v2033, %v2037
  %v2041 = vsel %vm248, %v2034, 0
  %v2043 = vsel %vm248, %v2038, 0
  %v2046 = vsel %vm253, %v2017, 0
  %v2049 = vsel %vm253, %v2018, 0
  %v2052 = vsel %vm253, %v2019, 0
  %v2055 = vsel %vm253, %v2020, 0
  %2057 = vmatprep.subr.mxu0 %v1982
  %2058 = vmatpush1.msra.mxu0 %v1981
  %2059 = vmatprep.subr.mxu0 %v1978
  %2060 = vmatpush1.msra.mxu0 %v1977
  %2061 = vmatprep.subr.mxu0 %v1974
  %2062 = vmatpush1.msra.mxu0 %v1973
  %2063 = vmatprep.subr.mxu0 %v1970
  %2064 = vmatpush1.msra.mxu0 %v1969
  %2065 = vmatprep.subr.mxu0 %v1966
  %2066 = vmatpush1.msra.mxu0 %v1965
  %2067 = vmatprep.subr.mxu0 %v1962
  %2068 = vmatpush1.msra.mxu0 %v1961
  %2069 = vmatprep.subr.mxu0 %v1958
  %2070 = vmatpush1.msra.mxu0 %v1957
  %2071 = vmatprep.subr.mxu0 %v1954
  %2072 = vmatpush1.msra.mxu0 %v1953
  %2073 = vmatprep.subr.mxu0 %v1950
  %2074 = vmatpush1.msra.mxu0 %v1949
  %2075 = vmatprep.subr.mxu0 %v1946
  %2076 = vmatpush1.msra.mxu0 %v1945
  %2077 = vmatprep.subr.mxu0 %v1942
  %2078 = vmatpush1.msra.mxu0 %v1941
  %2079 = vmatprep.subr.mxu0 %v1938
  %2080 = vmatpush1.msra.mxu0 %v1937
  %2081 = vmatprep.subr.mxu0 %v1934
  %2082 = vmatpush1.msra.mxu0 %v1933
  %2083 = vmatprep.subr.mxu0 %v1930
  %2084 = vmatpush1.msra.mxu0 %v1929
  %2085 = vmatprep.subr.mxu0 %v1926
  %2086 = vmatpush1.msra.mxu0 %v1925
  %2087 = vmatprep.subr.mxu0 %v1922
  %2088 = vmatpush1.msra.mxu0 %v1921
  %2089 = vmatprep.subr.mxu0 0.0
  %2090 = vmatpush2.msra.mxu0 0.0
  %2091 = vmatprep.subr.mxu0 0.0
  %2092 = vmatpush2.msra.mxu0 0.0
  %2093 = vmatprep.subr.mxu0 0.0
  %2094 = vmatpush2.msra.mxu0 0.0
  %2095 = vmatprep.subr.mxu0 0.0
  %2096 = vmatpush2.msra.mxu0 0.0
  %2097 = vmatprep.subr.mxu0 0.0
  %2098 = vmatpush2.msra.mxu0 0.0
  %2099 = vmatprep.subr.mxu0 0.0
  %2100 = vmatpush2.msra.mxu0 0.0
  %2101 = vmatprep.subr.mxu0 0.0
  %2102 = vmatpush2.msra.mxu0 0.0
  %2103 = vmatprep.subr.mxu0 %v2049
  %2104 = vmatpush2.msra.mxu0 %v2046
  %2105 = vmatprep.subr.mxu0 %v2014
  %2106 = vmatpush2.msra.mxu0 %v2013
  %2107 = vmatprep.subr.mxu0 %v2010
  %2108 = vmatpush2.msra.mxu0 %v2009
  %2109 = vmatprep.subr.mxu0 %v2006
  %2110 = vmatpush2.msra.mxu0 %v2005
  %2111 = vmatprep.subr.mxu0 %v2002
  %2112 = vmatpush2.msra.mxu0 %v2001
  %2113 = vmatprep.subr.mxu0 %v1998
  %2114 = vmatpush2.msra.mxu0 %v1997
  %2115 = vmatprep.subr.mxu0 %v1994
  %2116 = vmatpush2.msra.mxu0 %v1993
  %2117 = vmatprep.subr.mxu0 %v1990
  %2118 = vmatpush2.msra.mxu0 %v1989
  %2119 = vmatprep.subr.mxu0 %v1986
  %2120 = vmatpush2.msra.mxu0 %v1985
  %2121 = vmatprep.mubr.f32.mxu0 %v2041
  %2122 = vmatmul.mubr.f32.gmra.mxu0 %v2031
  %v2123 = vpop.f32.mrf.mxu0
  %v2124 = vadd.f32 0.0, %v2123
  %v2125 = vpop.f32.mrf.mxu0
  %v2126 = vadd.f32 0.0, %v2125
  %2127 = vmatprep.mubr.f32.mxu0 %v2043
  %2128 = vmatmul.mubr.f32.gmra.mxu0 %v2036
  %v2129 = vpop.f32.mrf.mxu0
  %v2130 = vadd.f32 0.0, %v2129
  %v2131 = vpop.f32.mrf.mxu0
  %v2132 = vadd.f32 0.0, %v2131
  %2133 = vdwg.mxu0
  %2134 = vmatprep.subr.mxu0 %v1984
  %2135 = vmatpush1.msra.mxu0 %v1983
  %2136 = vmatprep.subr.mxu0 %v1980
  %2137 = vmatpush1.msra.mxu0 %v1979
  %2138 = vmatprep.subr.mxu0 %v1976
  %2139 = vmatpush1.msra.mxu0 %v1975
  %2140 = vmatprep.subr.mxu0 %v1972
  %2141 = vmatpush1.msra.mxu0 %v1971
  %2142 = vmatprep.subr.mxu0 %v1968
  %2143 = vmatpush1.msra.mxu0 %v1967
  %2144 = vmatprep.subr.mxu0 %v1964
  %2145 = vmatpush1.msra.mxu0 %v1963
  %2146 = vmatprep.subr.mxu0 %v1960
  %2147 = vmatpush1.msra.mxu0 %v1959
  %2148 = vmatprep.subr.mxu0 %v1956
  %2149 = vmatpush1.msra.mxu0 %v1955
  %2150 = vmatprep.subr.mxu0 %v1952
  %2151 = vmatpush1.msra.mxu0 %v1951
  %2152 = vmatprep.subr.mxu0 %v1948
  %2153 = vmatpush1.msra.mxu0 %v1947
  %2154 = vmatprep.subr.mxu0 %v1944
  %2155 = vmatpush1.msra.mxu0 %v1943
  %2156 = vmatprep.subr.mxu0 %v1940
  %2157 = vmatpush1.msra.mxu0 %v1939
  %2158 = vmatprep.subr.mxu0 %v1936
  %2159 = vmatpush1.msra.mxu0 %v1935
  %2160 = vmatprep.subr.mxu0 %v1932
  %2161 = vmatpush1.msra.mxu0 %v1931
  %2162 = vmatprep.subr.mxu0 %v1928
  %2163 = vmatpush1.msra.mxu0 %v1927
  %2164 = vmatprep.subr.mxu0 %v1924
  %2165 = vmatpush1.msra.mxu0 %v1923
  %2166 = vmatprep.subr.mxu0 0.0
  %2167 = vmatpush2.msra.mxu0 0.0
  %2168 = vmatprep.subr.mxu0 0.0
  %2169 = vmatpush2.msra.mxu0 0.0
  %2170 = vmatprep.subr.mxu0 0.0
  %2171 = vmatpush2.msra.mxu0 0.0
  %2172 = vmatprep.subr.mxu0 0.0
  %2173 = vmatpush2.msra.mxu0 0.0
  %2174 = vmatprep.subr.mxu0 0.0
  %2175 = vmatpush2.msra.mxu0 0.0
  %2176 = vmatprep.subr.mxu0 0.0
  %2177 = vmatpush2.msra.mxu0 0.0
  %2178 = vmatprep.subr.mxu0 0.0
  %2179 = vmatpush2.msra.mxu0 0.0
  %2180 = vmatprep.subr.mxu0 %v2055
  %2181 = vmatpush2.msra.mxu0 %v2052
  %2182 = vmatprep.subr.mxu0 %v2016
  %2183 = vmatpush2.msra.mxu0 %v2015
  %2184 = vmatprep.subr.mxu0 %v2012
  %2185 = vmatpush2.msra.mxu0 %v2011
  %2186 = vmatprep.subr.mxu0 %v2008
  %2187 = vmatpush2.msra.mxu0 %v2007
  %2188 = vmatprep.subr.mxu0 %v2004
  %2189 = vmatpush2.msra.mxu0 %v2003
  %2190 = vmatprep.subr.mxu0 %v2000
  %2191 = vmatpush2.msra.mxu0 %v1999
  %2192 = vmatprep.subr.mxu0 %v1996
  %2193 = vmatpush2.msra.mxu0 %v1995
  %2194 = vmatprep.subr.mxu0 %v1992
  %2195 = vmatpush2.msra.mxu0 %v1991
  %2196 = vmatprep.subr.mxu0 %v1988
  %2197 = vmatpush2.msra.mxu0 %v1987
  %2198 = vmatprep.mubr.f32.mxu0 %v2041
  %2199 = vmatmul.mubr.f32.gmra.mxu0 %v2031
  %v2200 = vpop.f32.mrf.mxu0
  %v2201 = vadd.f32 0.0, %v2200
  %v2202 = vpop.f32.mrf.mxu0
  %v2203 = vadd.f32 0.0, %v2202
  %2204 = vmatprep.mubr.f32.mxu0 %v2043
  %2205 = vmatmul.mubr.f32.gmra.mxu0 %v2036
  %v2206 = vpop.f32.mrf.mxu0
  %v2207 = vadd.f32 0.0, %v2206
  %v2208 = vpop.f32.mrf.mxu0
  %v2209 = vadd.f32 0.0, %v2208
  %2210 = vdwg.mxu0
  %v2211 = vadd.f32 %v1725, %v2124
  %v2212 = vadd.f32 %v1726, %v2126
  %v2213 = vadd.f32 %v1727, %v2201
  %v2214 = vadd.f32 %v1728, %v2203
  %v2215 = vadd.f32 %v1729, %v2130
  %v2216 = vadd.f32 %v1730, %v2132
  %v2217 = vadd.f32 %v1731, %v2207
  %v2218 = vadd.f32 %v1732, %v2209
  %v2219 = vld [vmem:[%s0 + $0x40] sm:$0xff]
  %v2220 = vld [vmem:[%s0 + $0x48] sm:$0xff]
  %v2221 = vsel %vm248, %v121, 0
  %v2224 = vsel %vm248, %v2220, 0
  %2226 = vmatprep.subr.mxu0 %v1982
  %2227 = vmatpush1.msra.mxu0 %v1981
  %2228 = vmatprep.subr.mxu0 %v1978
  %2229 = vmatpush1.msra.mxu0 %v1977
  %2230 = vmatprep.subr.mxu0 %v1974
  %2231 = vmatpush1.msra.mxu0 %v1973
  %2232 = vmatprep.subr.mxu0 %v1970
  %2233 = vmatpush1.msra.mxu0 %v1969
  %2234 = vmatprep.subr.mxu0 %v1966
  %2235 = vmatpush1.msra.mxu0 %v1965
  %2236 = vmatprep.subr.mxu0 %v1962
  %2237 = vmatpush1.msra.mxu0 %v1961
  %2238 = vmatprep.subr.mxu0 %v1958
  %2239 = vmatpush1.msra.mxu0 %v1957
  %2240 = vmatprep.subr.mxu0 %v1954
  %2241 = vmatpush1.msra.mxu0 %v1953
  %2242 = vmatprep.subr.mxu0 %v1950
  %2243 = vmatpush1.msra.mxu0 %v1949
  %2244 = vmatprep.subr.mxu0 %v1946
  %2245 = vmatpush1.msra.mxu0 %v1945
  %2246 = vmatprep.subr.mxu0 %v1942
  %2247 = vmatpush1.msra.mxu0 %v1941
  %2248 = vmatprep.subr.mxu0 %v1938
  %2249 = vmatpush1.msra.mxu0 %v1937
  %2250 = vmatprep.subr.mxu0 %v1934
  %2251 = vmatpush1.msra.mxu0 %v1933
  %2252 = vmatprep.subr.mxu0 %v1930
  %2253 = vmatpush1.msra.mxu0 %v1929
  %2254 = vmatprep.subr.mxu0 %v1926
  %2255 = vmatpush1.msra.mxu0 %v1925
  %2256 = vmatprep.subr.mxu0 %v1922
  %2257 = vmatpush1.msra.mxu0 %v1921
  %2258 = vmatprep.subr.mxu0 0.0
  %2259 = vmatpush2.msra.mxu0 0.0
  %2260 = vmatprep.subr.mxu0 0.0
  %2261 = vmatpush2.msra.mxu0 0.0
  %2262 = vmatprep.subr.mxu0 0.0
  %2263 = vmatpush2.msra.mxu0 0.0
  %2264 = vmatprep.subr.mxu0 0.0
  %2265 = vmatpush2.msra.mxu0 0.0
  %2266 = vmatprep.subr.mxu0 0.0
  %2267 = vmatpush2.msra.mxu0 0.0
  %2268 = vmatprep.subr.mxu0 0.0
  %2269 = vmatpush2.msra.mxu0 0.0
  %2270 = vmatprep.subr.mxu0 0.0
  %2271 = vmatpush2.msra.mxu0 0.0
  %2272 = vmatprep.subr.mxu0 %v2049
  %2273 = vmatpush2.msra.mxu0 %v2046
  %2274 = vmatprep.subr.mxu0 %v2014
  %2275 = vmatpush2.msra.mxu0 %v2013
  %2276 = vmatprep.subr.mxu0 %v2010
  %2277 = vmatpush2.msra.mxu0 %v2009
  %2278 = vmatprep.subr.mxu0 %v2006
  %2279 = vmatpush2.msra.mxu0 %v2005
  %2280 = vmatprep.subr.mxu0 %v2002
  %2281 = vmatpush2.msra.mxu0 %v2001
  %2282 = vmatprep.subr.mxu0 %v1998
  %2283 = vmatpush2.msra.mxu0 %v1997
  %2284 = vmatprep.subr.mxu0 %v1994
  %2285 = vmatpush2.msra.mxu0 %v1993
  %2286 = vmatprep.subr.mxu0 %v1990
  %2287 = vmatpush2.msra.mxu0 %v1989
  %2288 = vmatprep.subr.mxu0 %v1986
  %2289 = vmatpush2.msra.mxu0 %v1985
  %2290 = vmatprep.mubr.f32.mxu0 %v2221
  %2291 = vmatmul.mubr.f32.gmra.mxu0 %v120
  %v2292 = vpop.f32.mrf.mxu0
  %v2293 = vadd.f32 0.0, %v2292
  %v2294 = vpop.f32.mrf.mxu0
  %v2295 = vadd.f32 0.0, %v2294
  %2296 = vmatprep.mubr.f32.mxu0 %v2224
  %2297 = vmatmul.mubr.f32.gmra.mxu0 %v2219
  %v2298 = vpop.f32.mrf.mxu0
  %v2299 = vadd.f32 0.0, %v2298
  %v2300 = vpop.f32.mrf.mxu0
  %v2301 = vadd.f32 0.0, %v2300
  %2302 = vdwg.mxu0
  %2303 = vmatprep.subr.mxu0 %v1984
  %2304 = vmatpush1.msra.mxu0 %v1983
  %2305 = vmatprep.subr.mxu0 %v1980
  %2306 = vmatpush1.msra.mxu0 %v1979
  %2307 = vmatprep.subr.mxu0 %v1976
  %2308 = vmatpush1.msra.mxu0 %v1975
  %2309 = vmatprep.subr.mxu0 %v1972
  %2310 = vmatpush1.msra.mxu0 %v1971
  %2311 = vmatprep.subr.mxu0 %v1968
  %2312 = vmatpush1.msra.mxu0 %v1967
  %2313 = vmatprep.subr.mxu0 %v1964
  %2314 = vmatpush1.msra.mxu0 %v1963
  %2315 = vmatprep.subr.mxu0 %v1960
  %2316 = vmatpush1.msra.mxu0 %v1959
  %2317 = vmatprep.subr.mxu0 %v1956
  %2318 = vmatpush1.msra.mxu0 %v1955
  %2319 = vmatprep.subr.mxu0 %v1952
  %2320 = vmatpush1.msra.mxu0 %v1951
  %2321 = vmatprep.subr.mxu0 %v1948
  %2322 = vmatpush1.msra.mxu0 %v1947
  %2323 = vmatprep.subr.mxu0 %v1944
  %2324 = vmatpush1.msra.mxu0 %v1943
  %2325 = vmatprep.subr.mxu0 %v1940
  %2326 = vmatpush1.msra.mxu0 %v1939
  %2327 = vmatprep.subr.mxu0 %v1936
  %2328 = vmatpush1.msra.mxu0 %v1935
  %2329 = vmatprep.subr.mxu0 %v1932
  %2330 = vmatpush1.msra.mxu0 %v1931
  %2331 = vmatprep.subr.mxu0 %v1928
  %2332 = vmatpush1.msra.mxu0 %v1927
  %2333 = vmatprep.subr.mxu0 %v1924
  %2334 = vmatpush1.msra.mxu0 %v1923
  %2335 = vmatprep.subr.mxu0 0.0
  %2336 = vmatpush2.msra.mxu0 0.0
  %2337 = vmatprep.subr.mxu0 0.0
  %2338 = vmatpush2.msra.mxu0 0.0
  %2339 = vmatprep.subr.mxu0 0.0
  %2340 = vmatpush2.msra.mxu0 0.0
  %2341 = vmatprep.subr.mxu0 0.0
  %2342 = vmatpush2.msra.mxu0 0.0
  %2343 = vmatprep.subr.mxu0 0.0
  %2344 = vmatpush2.msra.mxu0 0.0
  %2345 = vmatprep.subr.mxu0 0.0
  %2346 = vmatpush2.msra.mxu0 0.0
  %2347 = vmatprep.subr.mxu0 0.0
  %2348 = vmatpush2.msra.mxu0 0.0
  %2349 = vmatprep.subr.mxu0 %v2055
  %2350 = vmatpush2.msra.mxu0 %v2052
  %2351 = vmatprep.subr.mxu0 %v2016
  %2352 = vmatpush2.msra.mxu0 %v2015
  %2353 = vmatprep.subr.mxu0 %v2012
  %2354 = vmatpush2.msra.mxu0 %v2011
  %2355 = vmatprep.subr.mxu0 %v2008
  %2356 = vmatpush2.msra.mxu0 %v2007
  %2357 = vmatprep.subr.mxu0 %v2004
  %2358 = vmatpush2.msra.mxu0 %v2003
  %2359 = vmatprep.subr.mxu0 %v2000
  %2360 = vmatpush2.msra.mxu0 %v1999
  %2361 = vmatprep.subr.mxu0 %v1996
  %2362 = vmatpush2.msra.mxu0 %v1995
  %2363 = vmatprep.subr.mxu0 %v1992
  %2364 = vmatpush2.msra.mxu0 %v1991
  %2365 = vmatprep.subr.mxu0 %v1988
  %2366 = vmatpush2.msra.mxu0 %v1987
  %2367 = vmatprep.mubr.f32.mxu0 %v2221
  %2368 = vmatmul.mubr.f32.gmra.mxu0 %v120
  %v2369 = vpop.f32.mrf.mxu0
  %v2370 = vadd.f32 0.0, %v2369
  %v2371 = vpop.f32.mrf.mxu0
  %v2372 = vadd.f32 0.0, %v2371
  %2373 = vmatprep.mubr.f32.mxu0 %v2224
  %2374 = vmatmul.mubr.f32.gmra.mxu0 %v2219
  %v2375 = vpop.f32.mrf.mxu0
  %v2376 = vadd.f32 0.0, %v2375
  %v2377 = vpop.f32.mrf.mxu0
  %v2378 = vadd.f32 0.0, %v2377
  %2379 = vdwg.mxu0
  %v2380 = vadd.f32 %v1912, %v2293
  %v2381 = vadd.f32 %v1913, %v2295
  %v2382 = vadd.f32 %v1914, %v2370
  %v2383 = vadd.f32 %v1915, %v2372
  %v2384 = vadd.f32 %v1916, %v2299
  %v2385 = vadd.f32 %v1917, %v2301
  %v2386 = vadd.f32 %v1918, %v2376
  %v2387 = vadd.f32 %v1919, %v2378
  %v2388 = vld [vmem:[%s2] sm:$0xf]
  %v2390 = vlaneseq
  %v2391 = vshrl.u32 %v2390, 7
  %v2392 = vsub.s32 0, %v2391
  %v2393 = vrot.slane %v2388, %v2392
  %v2394 = vlaneseq
  %v2395 = vshrl.u32 %v2394, 7
  %v2396 = vsub.s32 1, %v2395
  %v2397 = vrot.slane %v2388, %v2396
  %v2398 = vlaneseq
  %v2399 = vshrl.u32 %v2398, 7
  %v2400 = vsub.s32 2, %v2399
  %v2401 = vrot.slane %v2388, %v2400
  %v2402 = vlaneseq
  %v2403 = vshrl.u32 %v2402, 7
  %v2404 = vsub.s32 3, %v2403
  %v2405 = vrot.slane %v2388, %v2404
  %v2410 = vadd.f32 %v2211, %v2393
  %v2411 = vadd.f32 %v2212, %v2397
  %v2412 = vadd.f32 %v2213, %v2401
  %v2413 = vadd.f32 %v2214, %v2405
  %v2414 = vadd.f32 %v2215, %v2393
  %v2415 = vadd.f32 %v2216, %v2397
  %v2416 = vadd.f32 %v2217, %v2401
  %v2417 = vadd.f32 %v2218, %v2405
  %vm2418 = vcmp.gt.f32.partialorder %v2410, 0.0
  %vm2419 = vcmp.gt.f32.partialorder %v2411, 0.0
  %vm2420 = vcmp.gt.f32.partialorder %v2412, 0.0
  %vm2421 = vcmp.gt.f32.partialorder %v2413, 0.0
  %vm2422 = vcmp.gt.f32.partialorder %v2414, 0.0
  %vm2423 = vcmp.gt.f32.partialorder %v2415, 0.0
  %vm2424 = vcmp.gt.f32.partialorder %v2416, 0.0
  %vm2425 = vcmp.gt.f32.partialorder %v2417, 0.0
  %v2426 = vmul.f32 %v2410, -0.9
  %v2427 = vmul.f32 %v2411, -0.9
  %v2428 = vmul.f32 %v2412, -0.9
  %v2429 = vmul.f32 %v2413, -0.9
  %v2430 = vmul.f32 %v2414, -0.9
  %v2431 = vmul.f32 %v2415, -0.9
  %v2432 = vmul.f32 %v2416, -0.9
  %v2433 = vmul.f32 %v2417, -0.9
  %v2434 = vsel %vm2418, %v2410, %v2426
  %v2435 = vsel %vm2419, %v2411, %v2427
  %v2436 = vsel %vm2420, %v2412, %v2428
  %v2437 = vsel %vm2421, %v2413, %v2429
  %v2438 = vsel %vm2422, %v2414, %v2430
  %v2439 = vsel %vm2423, %v2415, %v2431
  %v2440 = vsel %vm2424, %v2416, %v2432
  %v2441 = vsel %vm2425, %v2417, %v2433
  %2442 = vst [vmem:[%s3] sm:$0xff] %v2434
  %2443 = vst [vmem:[%s3 + $0x8] sm:$0xff] %v2435
  %2444 = vst [vmem:[%s3 + $0x10] sm:$0xff] %v2436
  %vm2445 = vcmask 785408
  %2446 = vst.msk [vmem:[%s3 + $0x18] sm:$0xff] %vm2445, %v2437
  %2447 = vst [vmem:[%s3 + $0x20] sm:$0xff] %v2438
  %2448 = vst [vmem:[%s3 + $0x28] sm:$0xff] %v2439
  %2449 = vst [vmem:[%s3 + $0x30] sm:$0xff] %v2440
  %2450 = vst.msk [vmem:[%s3 + $0x38] sm:$0xff] %vm2445, %v2441
  %v2451 = vadd.f32 %v2380, %v2393
  %v2452 = vadd.f32 %v2381, %v2397
  %v2453 = vadd.f32 %v2382, %v2401
  %v2454 = vadd.f32 %v2383, %v2405
  %v2455 = vadd.f32 %v2384, %v2393
  %v2456 = vadd.f32 %v2385, %v2397
  %v2457 = vadd.f32 %v2386, %v2401
  %v2458 = vadd.f32 %v2387, %v2405
  %vm2459 = vcmp.gt.f32.partialorder %v2451, 0.0
  %vm2460 = vcmp.gt.f32.partialorder %v2452, 0.0
  %vm2461 = vcmp.gt.f32.partialorder %v2453, 0.0
  %vm2462 = vcmp.gt.f32.partialorder %v2454, 0.0
  %vm2463 = vcmp.gt.f32.partialorder %v2455, 0.0
  %vm2464 = vcmp.gt.f32.partialorder %v2456, 0.0
  %vm2465 = vcmp.gt.f32.partialorder %v2457, 0.0
  %vm2466 = vcmp.gt.f32.partialorder %v2458, 0.0
  %v2467 = vmul.f32 %v2451, -0.9
  %v2468 = vmul.f32 %v2452, -0.9
  %v2469 = vmul.f32 %v2453, -0.9
  %v2470 = vmul.f32 %v2454, -0.9
  %v2471 = vmul.f32 %v2455, -0.9
  %v2472 = vmul.f32 %v2456, -0.9
  %v2473 = vmul.f32 %v2457, -0.9
  %v2474 = vmul.f32 %v2458, -0.9
  %v2475 = vsel %vm2459, %v2451, %v2467
  %v2476 = vsel %vm2460, %v2452, %v2468
  %v2477 = vsel %vm2461, %v2453, %v2469
  %v2478 = vsel %vm2462, %v2454, %v2470
  %v2479 = vsel %vm2463, %v2455, %v2471
  %v2480 = vsel %vm2464, %v2456, %v2472
  %v2481 = vsel %vm2465, %v2457, %v2473
  %v2482 = vsel %vm2466, %v2458, %v2474
  %2483 = vst [vmem:[%s3 + $0x40] sm:$0xff] %v2475
  %2484 = vst [vmem:[%s3 + $0x48] sm:$0xff] %v2476
  %2485 = vst [vmem:[%s3 + $0x50] sm:$0xff] %v2477
  %2486 = vst.msk [vmem:[%s3 + $0x58] sm:$0xff] %vm2445, %v2478
  %2487 = vst [vmem:[%s3 + $0x60] sm:$0xff] %v2479
  %2488 = vst [vmem:[%s3 + $0x68] sm:$0xff] %v2480
  %2489 = vst [vmem:[%s3 + $0x70] sm:$0xff] %v2481
  %2490 = vst.msk [vmem:[%s3 + $0x78] sm:$0xff] %vm2445, %v2482
  // Predicated region
  $region14: #{conv_transpose_leaky.1} parent=0 // pred_check
    _
  $region15: #{conv_transpose_leaky.1} parent=0 // pred_check_branch
    %2492 = sbr.rel (0) target = $region17
  $region16: #{conv_transpose_leaky.1} parent=0 // pred_region
    _
  $region17: #{conv_transpose_leaky.1} parent=0 // pred_fallthru
    _
  // Predicated region
  $region18: #{conv_transpose_leaky.1} parent=0 // pred_check
    _
  $region19: #{conv_transpose_leaky.1} parent=0 // pred_check_branch
    %2494 = sbr.rel (0) target = $region21
  $region20: #{conv_transpose_leaky.1} parent=0 // pred_region
    _
  $region21: #{conv_transpose_leaky.1} parent=0 // pred_fallthru
    _

</llo_original>
